<compile_context>
chip_gen: v7x
topology: tpu7x:2x2x1
jax: 0.10.0
libtpu: 0.0.40
codegen_flags: <defaults>
</compile_context>

<pallas_src>
import functools

import jax
import jax.numpy as jnp
from jax.experimental import pallas as pl
from jax.experimental.pallas import tpu as pltpu


def _round_up(x: int, m: int) -> int:
    return ((x + m - 1) // m) * m


def _matvec_kernel(a_ref, b_ref, o_ref, acc_ref, *, k_total):
    # Grid: (M tiles, K tiles); axis 1 (K) is the reduction axis (innermost).
    k = pl.program_id(1)
    _, tk = a_ref.shape
    n_chunks = tk // 128
    ragged_k = (k_total % tk) != 0  # static Python bool -> compiled out if False

    @pl.when(k == 0)
    def _init():
        acc_ref[...] = jnp.zeros_like(acc_ref)

    # Fold the (tm, tk) product into the lane-dense (tm, 128) accumulator with
    # static 128-lane slices (vreg-aligned, pure VPU work under the DMA).
    acc = acc_ref[...]
    for j in range(n_chunks):
        sl = slice(j * 128, (j + 1) * 128)
        a_c = a_ref[:, sl].astype(jnp.float32)      # (tm, 128)
        b_c = b_ref[:, sl].astype(jnp.float32)      # (1, 128), broadcast over rows
        if ragged_k:
            # Mask A's out-of-bounds K columns: boundary-block contents are
            # unspecified and garbage * 0 could be NaN, so zero A explicitly.
            col = (jax.lax.broadcasted_iota(jnp.int32, (1, 128), 1)
                   + (k * tk + j * 128))
            a_c = jnp.where(col < k_total, a_c, 0.0)
        acc = acc + a_c * b_c
    acc_ref[...] = acc

    # Single cross-lane reduce + masked (tm, 1) store, once per M tile.
    @pl.when(k == pl.num_programs(1) - 1)
    def _finish():
        o_ref[...] = jnp.sum(acc_ref[...], axis=-1, keepdims=True).astype(o_ref.dtype)


def matvec(a: jax.Array, b: jax.Array, *, tm_cap: int = 256, tk_cap: int = 8192) -> jax.Array:
    """C = A @ B for A of shape (M, K) and B of shape (K, 1)."""
    M, K = a.shape
    assert b.shape == (K, 1), f"expected B of shape ({K}, 1), got {b.shape}"
    out_dtype = jnp.promote_types(a.dtype, b.dtype)

    # ---- tile selection: fixed large caps, decoupled from divisibility ----
    tk = min(tk_cap, _round_up(K, 128))
    tm = min(tm_cap, _round_up(M, 8))
    # Keep >= 2 M tiles when M is large enough so the "parallel" M axis can
    # shard across both v7x TensorCores (no effect on v5e/v6e).
    if pl.cdiv(M, tm) < 2 and M >= 16:
        tm = _round_up(pl.cdiv(M, 2), 8)

    m_tiles = pl.cdiv(M, tm)
    k_tiles = pl.cdiv(K, tk)

    # B is tiny (K * itemsize bytes): reshape to a row and zero-pad it to a
    # multiple of tk so boundary B blocks never contain garbage.  A is streamed
    # as-is (no wrapper-side astype/pad copies of A).
    K_b = k_tiles * tk
    b_row = b.reshape(1, K)
    if K_b != K:
        b_row = jnp.pad(b_row, ((0, 0), (0, K_b - K)))

    kernel = functools.partial(_matvec_kernel, k_total=K)

    out = pl.pallas_call(
        kernel,
        out_shape=jax.ShapeDtypeStruct((M, 1), out_dtype),
        grid_spec=pltpu.PrefetchScalarGridSpec(
            num_scalar_prefetch=0,
            grid=(m_tiles, k_tiles),
            in_specs=[
                # A: large streaming (tm, tk) blocks (double-buffered).
                pl.BlockSpec((tm, tk), lambda i, k: (i, k)),
                # B: blocked along K — negligible refetch, frees VMEM.
                pl.BlockSpec((1, tk), lambda i, k: (0, k)),
            ],
            out_specs=pl.BlockSpec((tm, 1), lambda i, k: (i, 0)),
            scratch_shapes=[pltpu.VMEM((tm, 128), jnp.float32)],
        ),
        compiler_params=pltpu.CompilerParams(
            dimension_semantics=("parallel", "arbitrary"),
            vmem_limit_bytes=48 * 1024 * 1024,
        ),
        cost_estimate=pl.CostEstimate(
            flops=2 * M * K,
            transcendentals=0,
            bytes_accessed=(a.size * a.dtype.itemsize
                            + K_b * b_row.dtype.itemsize
                            + M * jnp.dtype(out_dtype).itemsize),
        ),
    )(a, b_row)

    return out


if __name__ == "__main__":
    root_key = jax.random.PRNGKey(0)

    def run_case(M, K):
        k_a, k_b = jax.random.split(jax.random.fold_in(root_key, M * 100003 + K))
        A = jax.random.normal(k_a, (M, K), dtype=jnp.float32)
        B = jax.random.normal(k_b, (K, 1), dtype=jnp.float32)

        C = jax.block_until_ready(matvec(A, B))

        # High-precision reference.
        C_ref = jnp.matmul(A, B, precision=jax.lax.Precision.HIGHEST)
        assert C.shape == (M, 1)
        err = float(jnp.max(jnp.abs(C - C_ref)))
        assert jnp.allclose(C, C_ref, atol=1e-2, rtol=1e-3), (
            f"mismatch vs reference for shape ({M}, {K}); max abs err {err}"
        )

    # Small shapes consistent with the module's (M, K) x (K, 1) contract.
    run_case(256, 4096)    # clean tiling, 2 M tiles (megacore path)
    run_case(130, 300)     # ragged M and K -> boundary blocks + in-kernel K mask
    run_case(64, 8320)     # K straddles the tk cap -> partial last K tile

    print("KERNEL_OK")
</pallas_src>

<mosaic_0001>
module attributes {stable_mosaic.version = 11 : i64} {
  func.func @_matvec_kernel(%arg0: i32, %arg1: i32, %arg2: memref<128x4096xf32, #tpu.memory_space<vmem>>, %arg3: memref<1x4096xf32, #tpu.memory_space<vmem>>, %arg4: memref<128x1xf32, #tpu.memory_space<vmem>>, %arg5: memref<128x128xf32, #tpu.memory_space<vmem>>) attributes {dimension_semantics = [#tpu.dimension_semantics<parallel>, #tpu.dimension_semantics<arbitrary>], iteration_bounds = array<i64: 2, 1>, scalar_prefetch = 0 : i64, scratch_operands = 1 : i64, tpu.core_type = #tpu.core_type<tc>, window_params = [{transform_indices = @transform_0, window_bounds = array<i64: 128, 4096>}, {transform_indices = @transform_1, window_bounds = array<i64: 1, 4096>}, {transform_indices = @transform_2, window_bounds = array<i64: 128, 1>}]} {
    %c0_i32 = arith.constant 0 : i32
    %0 = arith.cmpi eq, %arg1, %c0_i32 : i32
    %1 = arith.extui %0 : i1 to i32
    %c0_i32_0 = arith.constant 0 : i32
    %2 = arith.cmpi ne, %1, %c0_i32_0 : i32
    scf.if %2 {
      %cst = arith.constant 0.000000e+00 : f32
      %168 = vector.broadcast %cst : f32 to vector<128x128xf32>
      %c0_103 = arith.constant 0 : index
      %c0_104 = arith.constant 0 : index
      %169 = vector.load %arg5[%c0_103, %c0_104] : memref<128x128xf32, #tpu.memory_space<vmem>>, vector<128x128xf32>
      tpu.vector_store %arg5[%c0_103, %c0_104], %168 {strides = array<i32>} : memref<128x128xf32, #tpu.memory_space<vmem>>, vector<128x128xf32>,
    } else {
    }
    %c0 = arith.constant 0 : index
    %c0_1 = arith.constant 0 : index
    %3 = vector.load %arg5[%c0, %c0_1] : memref<128x128xf32, #tpu.memory_space<vmem>>, vector<128x128xf32>
    %c0_2 = arith.constant 0 : index
    %c0_3 = arith.constant 0 : index
    %4 = vector.load %arg2[%c0_2, %c0_3] : memref<128x4096xf32, #tpu.memory_space<vmem>>, vector<128x128xf32>
    %c0_4 = arith.constant 0 : index
    %c0_5 = arith.constant 0 : index
    %5 = vector.load %arg3[%c0_4, %c0_5] : memref<1x4096xf32, #tpu.memory_space<vmem>>, vector<1x128xf32>
    %6 = vector.broadcast %5 : vector<1x128xf32> to vector<128x128xf32>
    %7 = arith.mulf %4, %6 : vector<128x128xf32>
    %8 = arith.addf %3, %7 : vector<128x128xf32>
    %c0_6 = arith.constant 0 : index
    %c128 = arith.constant 128 : index
    %9 = vector.load %arg2[%c0_6, %c128] : memref<128x4096xf32, #tpu.memory_space<vmem>>, vector<128x128xf32>
    %c0_7 = arith.constant 0 : index
    %c128_8 = arith.constant 128 : index
    %10 = vector.load %arg3[%c0_7, %c128_8] : memref<1x4096xf32, #tpu.memory_space<vmem>>, vector<1x128xf32>
    %11 = vector.broadcast %10 : vector<1x128xf32> to vector<128x128xf32>
    %12 = arith.mulf %9, %11 : vector<128x128xf32>
    %13 = arith.addf %8, %12 : vector<128x128xf32>
    %c0_9 = arith.constant 0 : index
    %c256 = arith.constant 256 : index
    %14 = vector.load %arg2[%c0_9, %c256] : memref<128x4096xf32, #tpu.memory_space<vmem>>, vector<128x128xf32>
    %c0_10 = arith.constant 0 : index
    %c256_11 = arith.constant 256 : index
    %15 = vector.load %arg3[%c0_10, %c256_11] : memref<1x4096xf32, #tpu.memory_space<vmem>>, vector<1x128xf32>
    %16 = vector.broadcast %15 : vector<1x128xf32> to vector<128x128xf32>
    %17 = arith.mulf %14, %16 : vector<128x128xf32>
    %18 = arith.addf %13, %17 : vector<128x128xf32>
    %c0_12 = arith.constant 0 : index
    %c384 = arith.constant 384 : index
    %19 = vector.load %arg2[%c0_12, %c384] : memref<128x4096xf32, #tpu.memory_space<vmem>>, vector<128x128xf32>
    %c0_13 = arith.constant 0 : index
    %c384_14 = arith.constant 384 : index
    %20 = vector.load %arg3[%c0_13, %c384_14] : memref<1x4096xf32, #tpu.memory_space<vmem>>, vector<1x128xf32>
    %21 = vector.broadcast %20 : vector<1x128xf32> to vector<128x128xf32>
    %22 = arith.mulf %19, %21 : vector<128x128xf32>
    %23 = arith.addf %18, %22 : vector<128x128xf32>
    %c0_15 = arith.constant 0 : index
    %c512 = arith.constant 512 : index
    %24 = vector.load %arg2[%c0_15, %c512] : memref<128x4096xf32, #tpu.memory_space<vmem>>, vector<128x128xf32>
    %c0_16 = arith.constant 0 : index
    %c512_17 = arith.constant 512 : index
    %25 = vector.load %arg3[%c0_16, %c512_17] : memref<1x4096xf32, #tpu.memory_space<vmem>>, vector<1x128xf32>
    %26 = vector.broadcast %25 : vector<1x128xf32> to vector<128x128xf32>
    %27 = arith.mulf %24, %26 : vector<128x128xf32>
    %28 = arith.addf %23, %27 : vector<128x128xf32>
    %c0_18 = arith.constant 0 : index
    %c640 = arith.constant 640 : index
    %29 = vector.load %arg2[%c0_18, %c640] : memref<128x4096xf32, #tpu.memory_space<vmem>>, vector<128x128xf32>
    %c0_19 = arith.constant 0 : index
    %c640_20 = arith.constant 640 : index
    %30 = vector.load %arg3[%c0_19, %c640_20] : memref<1x4096xf32, #tpu.memory_space<vmem>>, vector<1x128xf32>
    %31 = vector.broadcast %30 : vector<1x128xf32> to vector<128x128xf32>
    %32 = arith.mulf %29, %31 : vector<128x128xf32>
    %33 = arith.addf %28, %32 : vector<128x128xf32>
    %c0_21 = arith.constant 0 : index
    %c768 = arith.constant 768 : index
    %34 = vector.load %arg2[%c0_21, %c768] : memref<128x4096xf32, #tpu.memory_space<vmem>>, vector<128x128xf32>
    %c0_22 = arith.constant 0 : index
    %c768_23 = arith.constant 768 : index
    %35 = vector.load %arg3[%c0_22, %c768_23] : memref<1x4096xf32, #tpu.memory_space<vmem>>, vector<1x128xf32>
    %36 = vector.broadcast %35 : vector<1x128xf32> to vector<128x128xf32>
    %37 = arith.mulf %34, %36 : vector<128x128xf32>
    %38 = arith.addf %33, %37 : vector<128x128xf32>
    %c0_24 = arith.constant 0 : index
    %c896 = arith.constant 896 : index
    %39 = vector.load %arg2[%c0_24, %c896] : memref<128x4096xf32, #tpu.memory_space<vmem>>, vector<128x128xf32>
    %c0_25 = arith.constant 0 : index
    %c896_26 = arith.constant 896 : index
    %40 = vector.load %arg3[%c0_25, %c896_26] : memref<1x4096xf32, #tpu.memory_space<vmem>>, vector<1x128xf32>
    %41 = vector.broadcast %40 : vector<1x128xf32> to vector<128x128xf32>
    %42 = arith.mulf %39, %41 : vector<128x128xf32>
    %43 = arith.addf %38, %42 : vector<128x128xf32>
    %c0_27 = arith.constant 0 : index
    %c1024 = arith.constant 1024 : index
    %44 = vector.load %arg2[%c0_27, %c1024] : memref<128x4096xf32, #tpu.memory_space<vmem>>, vector<128x128xf32>
    %c0_28 = arith.constant 0 : index
    %c1024_29 = arith.constant 1024 : index
    %45 = vector.load %arg3[%c0_28, %c1024_29] : memref<1x4096xf32, #tpu.memory_space<vmem>>, vector<1x128xf32>
    %46 = vector.broadcast %45 : vector<1x128xf32> to vector<128x128xf32>
    %47 = arith.mulf %44, %46 : vector<128x128xf32>
    %48 = arith.addf %43, %47 : vector<128x128xf32>
    %c0_30 = arith.constant 0 : index
    %c1152 = arith.constant 1152 : index
    %49 = vector.load %arg2[%c0_30, %c1152] : memref<128x4096xf32, #tpu.memory_space<vmem>>, vector<128x128xf32>
    %c0_31 = arith.constant 0 : index
    %c1152_32 = arith.constant 1152 : index
    %50 = vector.load %arg3[%c0_31, %c1152_32] : memref<1x4096xf32, #tpu.memory_space<vmem>>, vector<1x128xf32>
    %51 = vector.broadcast %50 : vector<1x128xf32> to vector<128x128xf32>
    %52 = arith.mulf %49, %51 : vector<128x128xf32>
    %53 = arith.addf %48, %52 : vector<128x128xf32>
    %c0_33 = arith.constant 0 : index
    %c1280 = arith.constant 1280 : index
    %54 = vector.load %arg2[%c0_33, %c1280] : memref<128x4096xf32, #tpu.memory_space<vmem>>, vector<128x128xf32>
    %c0_34 = arith.constant 0 : index
    %c1280_35 = arith.constant 1280 : index
    %55 = vector.load %arg3[%c0_34, %c1280_35] : memref<1x4096xf32, #tpu.memory_space<vmem>>, vector<1x128xf32>
    %56 = vector.broadcast %55 : vector<1x128xf32> to vector<128x128xf32>
    %57 = arith.mulf %54, %56 : vector<128x128xf32>
    %58 = arith.addf %53, %57 : vector<128x128xf32>
    %c0_36 = arith.constant 0 : index
    %c1408 = arith.constant 1408 : index
    %59 = vector.load %arg2[%c0_36, %c1408] : memref<128x4096xf32, #tpu.memory_space<vmem>>, vector<128x128xf32>
    %c0_37 = arith.constant 0 : index
    %c1408_38 = arith.constant 1408 : index
    %60 = vector.load %arg3[%c0_37, %c1408_38] : memref<1x4096xf32, #tpu.memory_space<vmem>>, vector<1x128xf32>
    %61 = vector.broadcast %60 : vector<1x128xf32> to vector<128x128xf32>
    %62 = arith.mulf %59, %61 : vector<128x128xf32>
    %63 = arith.addf %58, %62 : vector<128x128xf32>
    %c0_39 = arith.constant 0 : index
    %c1536 = arith.constant 1536 : index
    %64 = vector.load %arg2[%c0_39, %c1536] : memref<128x4096xf32, #tpu.memory_space<vmem>>, vector<128x128xf32>
    %c0_40 = arith.constant 0 : index
    %c1536_41 = arith.constant 1536 : index
    %65 = vector.load %arg3[%c0_40, %c1536_41] : memref<1x4096xf32, #tpu.memory_space<vmem>>, vector<1x128xf32>
    %66 = vector.broadcast %65 : vector<1x128xf32> to vector<128x128xf32>
    %67 = arith.mulf %64, %66 : vector<128x128xf32>
    %68 = arith.addf %63, %67 : vector<128x128xf32>
    %c0_42 = arith.constant 0 : index
    %c1664 = arith.constant 1664 : index
    %69 = vector.load %arg2[%c0_42, %c1664] : memref<128x4096xf32, #tpu.memory_space<vmem>>, vector<128x128xf32>
    %c0_43 = arith.constant 0 : index
    %c1664_44 = arith.constant 1664 : index
    %70 = vector.load %arg3[%c0_43, %c1664_44] : memref<1x4096xf32, #tpu.memory_space<vmem>>, vector<1x128xf32>
    %71 = vector.broadcast %70 : vector<1x128xf32> to vector<128x128xf32>
    %72 = arith.mulf %69, %71 : vector<128x128xf32>
    %73 = arith.addf %68, %72 : vector<128x128xf32>
    %c0_45 = arith.constant 0 : index
    %c1792 = arith.constant 1792 : index
    %74 = vector.load %arg2[%c0_45, %c1792] : memref<128x4096xf32, #tpu.memory_space<vmem>>, vector<128x128xf32>
    %c0_46 = arith.constant 0 : index
    %c1792_47 = arith.constant 1792 : index
    %75 = vector.load %arg3[%c0_46, %c1792_47] : memref<1x4096xf32, #tpu.memory_space<vmem>>, vector<1x128xf32>
    %76 = vector.broadcast %75 : vector<1x128xf32> to vector<128x128xf32>
    %77 = arith.mulf %74, %76 : vector<128x128xf32>
    %78 = arith.addf %73, %77 : vector<128x128xf32>
    %c0_48 = arith.constant 0 : index
    %c1920 = arith.constant 1920 : index
    %79 = vector.load %arg2[%c0_48, %c1920] : memref<128x4096xf32, #tpu.memory_space<vmem>>, vector<128x128xf32>
    %c0_49 = arith.constant 0 : index
    %c1920_50 = arith.constant 1920 : index
    %80 = vector.load %arg3[%c0_49, %c1920_50] : memref<1x4096xf32, #tpu.memory_space<vmem>>, vector<1x128xf32>
    %81 = vector.broadcast %80 : vector<1x128xf32> to vector<128x128xf32>
    %82 = arith.mulf %79, %81 : vector<128x128xf32>
    %83 = arith.addf %78, %82 : vector<128x128xf32>
    %c0_51 = arith.constant 0 : index
    %c2048 = arith.constant 2048 : index
    %84 = vector.load %arg2[%c0_51, %c2048] : memref<128x4096xf32, #tpu.memory_space<vmem>>, vector<128x128xf32>
    %c0_52 = arith.constant 0 : index
    %c2048_53 = arith.constant 2048 : index
    %85 = vector.load %arg3[%c0_52, %c2048_53] : memref<1x4096xf32, #tpu.memory_space<vmem>>, vector<1x128xf32>
    %86 = vector.broadcast %85 : vector<1x128xf32> to vector<128x128xf32>
    %87 = arith.mulf %84, %86 : vector<128x128xf32>
    %88 = arith.addf %83, %87 : vector<128x128xf32>
    %c0_54 = arith.constant 0 : index
    %c2176 = arith.constant 2176 : index
    %89 = vector.load %arg2[%c0_54, %c2176] : memref<128x4096xf32, #tpu.memory_space<vmem>>, vector<128x128xf32>
    %c0_55 = arith.constant 0 : index
    %c2176_56 = arith.constant 2176 : index
    %90 = vector.load %arg3[%c0_55, %c2176_56] : memref<1x4096xf32, #tpu.memory_space<vmem>>, vector<1x128xf32>
    %91 = vector.broadcast %90 : vector<1x128xf32> to vector<128x128xf32>
    %92 = arith.mulf %89, %91 : vector<128x128xf32>
    %93 = arith.addf %88, %92 : vector<128x128xf32>
    %c0_57 = arith.constant 0 : index
    %c2304 = arith.constant 2304 : index
    %94 = vector.load %arg2[%c0_57, %c2304] : memref<128x4096xf32, #tpu.memory_space<vmem>>, vector<128x128xf32>
    %c0_58 = arith.constant 0 : index
    %c2304_59 = arith.constant 2304 : index
    %95 = vector.load %arg3[%c0_58, %c2304_59] : memref<1x4096xf32, #tpu.memory_space<vmem>>, vector<1x128xf32>
    %96 = vector.broadcast %95 : vector<1x128xf32> to vector<128x128xf32>
    %97 = arith.mulf %94, %96 : vector<128x128xf32>
    %98 = arith.addf %93, %97 : vector<128x128xf32>
    %c0_60 = arith.constant 0 : index
    %c2432 = arith.constant 2432 : index
    %99 = vector.load %arg2[%c0_60, %c2432] : memref<128x4096xf32, #tpu.memory_space<vmem>>, vector<128x128xf32>
    %c0_61 = arith.constant 0 : index
    %c2432_62 = arith.constant 2432 : index
    %100 = vector.load %arg3[%c0_61, %c2432_62] : memref<1x4096xf32, #tpu.memory_space<vmem>>, vector<1x128xf32>
    %101 = vector.broadcast %100 : vector<1x128xf32> to vector<128x128xf32>
    %102 = arith.mulf %99, %101 : vector<128x128xf32>
    %103 = arith.addf %98, %102 : vector<128x128xf32>
    %c0_63 = arith.constant 0 : index
    %c2560 = arith.constant 2560 : index
    %104 = vector.load %arg2[%c0_63, %c2560] : memref<128x4096xf32, #tpu.memory_space<vmem>>, vector<128x128xf32>
    %c0_64 = arith.constant 0 : index
    %c2560_65 = arith.constant 2560 : index
    %105 = vector.load %arg3[%c0_64, %c2560_65] : memref<1x4096xf32, #tpu.memory_space<vmem>>, vector<1x128xf32>
    %106 = vector.broadcast %105 : vector<1x128xf32> to vector<128x128xf32>
    %107 = arith.mulf %104, %106 : vector<128x128xf32>
    %108 = arith.addf %103, %107 : vector<128x128xf32>
    %c0_66 = arith.constant 0 : index
    %c2688 = arith.constant 2688 : index
    %109 = vector.load %arg2[%c0_66, %c2688] : memref<128x4096xf32, #tpu.memory_space<vmem>>, vector<128x128xf32>
    %c0_67 = arith.constant 0 : index
    %c2688_68 = arith.constant 2688 : index
    %110 = vector.load %arg3[%c0_67, %c2688_68] : memref<1x4096xf32, #tpu.memory_space<vmem>>, vector<1x128xf32>
    %111 = vector.broadcast %110 : vector<1x128xf32> to vector<128x128xf32>
    %112 = arith.mulf %109, %111 : vector<128x128xf32>
    %113 = arith.addf %108, %112 : vector<128x128xf32>
    %c0_69 = arith.constant 0 : index
    %c2816 = arith.constant 2816 : index
    %114 = vector.load %arg2[%c0_69, %c2816] : memref<128x4096xf32, #tpu.memory_space<vmem>>, vector<128x128xf32>
    %c0_70 = arith.constant 0 : index
    %c2816_71 = arith.constant 2816 : index
    %115 = vector.load %arg3[%c0_70, %c2816_71] : memref<1x4096xf32, #tpu.memory_space<vmem>>, vector<1x128xf32>
    %116 = vector.broadcast %115 : vector<1x128xf32> to vector<128x128xf32>
    %117 = arith.mulf %114, %116 : vector<128x128xf32>
    %118 = arith.addf %113, %117 : vector<128x128xf32>
    %c0_72 = arith.constant 0 : index
    %c2944 = arith.constant 2944 : index
    %119 = vector.load %arg2[%c0_72, %c2944] : memref<128x4096xf32, #tpu.memory_space<vmem>>, vector<128x128xf32>
    %c0_73 = arith.constant 0 : index
    %c2944_74 = arith.constant 2944 : index
    %120 = vector.load %arg3[%c0_73, %c2944_74] : memref<1x4096xf32, #tpu.memory_space<vmem>>, vector<1x128xf32>
    %121 = vector.broadcast %120 : vector<1x128xf32> to vector<128x128xf32>
    %122 = arith.mulf %119, %121 : vector<128x128xf32>
    %123 = arith.addf %118, %122 : vector<128x128xf32>
    %c0_75 = arith.constant 0 : index
    %c3072 = arith.constant 3072 : index
    %124 = vector.load %arg2[%c0_75, %c3072] : memref<128x4096xf32, #tpu.memory_space<vmem>>, vector<128x128xf32>
    %c0_76 = arith.constant 0 : index
    %c3072_77 = arith.constant 3072 : index
    %125 = vector.load %arg3[%c0_76, %c3072_77] : memref<1x4096xf32, #tpu.memory_space<vmem>>, vector<1x128xf32>
    %126 = vector.broadcast %125 : vector<1x128xf32> to vector<128x128xf32>
    %127 = arith.mulf %124, %126 : vector<128x128xf32>
    %128 = arith.addf %123, %127 : vector<128x128xf32>
    %c0_78 = arith.constant 0 : index
    %c3200 = arith.constant 3200 : index
    %129 = vector.load %arg2[%c0_78, %c3200] : memref<128x4096xf32, #tpu.memory_space<vmem>>, vector<128x128xf32>
    %c0_79 = arith.constant 0 : index
    %c3200_80 = arith.constant 3200 : index
    %130 = vector.load %arg3[%c0_79, %c3200_80] : memref<1x4096xf32, #tpu.memory_space<vmem>>, vector<1x128xf32>
    %131 = vector.broadcast %130 : vector<1x128xf32> to vector<128x128xf32>
    %132 = arith.mulf %129, %131 : vector<128x128xf32>
    %133 = arith.addf %128, %132 : vector<128x128xf32>
    %c0_81 = arith.constant 0 : index
    %c3328 = arith.constant 3328 : index
    %134 = vector.load %arg2[%c0_81, %c3328] : memref<128x4096xf32, #tpu.memory_space<vmem>>, vector<128x128xf32>
    %c0_82 = arith.constant 0 : index
    %c3328_83 = arith.constant 3328 : index
    %135 = vector.load %arg3[%c0_82, %c3328_83] : memref<1x4096xf32, #tpu.memory_space<vmem>>, vector<1x128xf32>
    %136 = vector.broadcast %135 : vector<1x128xf32> to vector<128x128xf32>
    %137 = arith.mulf %134, %136 : vector<128x128xf32>
    %138 = arith.addf %133, %137 : vector<128x128xf32>
    %c0_84 = arith.constant 0 : index
    %c3456 = arith.constant 3456 : index
    %139 = vector.load %arg2[%c0_84, %c3456] : memref<128x4096xf32, #tpu.memory_space<vmem>>, vector<128x128xf32>
    %c0_85 = arith.constant 0 : index
    %c3456_86 = arith.constant 3456 : index
    %140 = vector.load %arg3[%c0_85, %c3456_86] : memref<1x4096xf32, #tpu.memory_space<vmem>>, vector<1x128xf32>
    %141 = vector.broadcast %140 : vector<1x128xf32> to vector<128x128xf32>
    %142 = arith.mulf %139, %141 : vector<128x128xf32>
    %143 = arith.addf %138, %142 : vector<128x128xf32>
    %c0_87 = arith.constant 0 : index
    %c3584 = arith.constant 3584 : index
    %144 = vector.load %arg2[%c0_87, %c3584] : memref<128x4096xf32, #tpu.memory_space<vmem>>, vector<128x128xf32>
    %c0_88 = arith.constant 0 : index
    %c3584_89 = arith.constant 3584 : index
    %145 = vector.load %arg3[%c0_88, %c3584_89] : memref<1x4096xf32, #tpu.memory_space<vmem>>, vector<1x128xf32>
    %146 = vector.broadcast %145 : vector<1x128xf32> to vector<128x128xf32>
    %147 = arith.mulf %144, %146 : vector<128x128xf32>
    %148 = arith.addf %143, %147 : vector<128x128xf32>
    %c0_90 = arith.constant 0 : index
    %c3712 = arith.constant 3712 : index
    %149 = vector.load %arg2[%c0_90, %c3712] : memref<128x4096xf32, #tpu.memory_space<vmem>>, vector<128x128xf32>
    %c0_91 = arith.constant 0 : index
    %c3712_92 = arith.constant 3712 : index
    %150 = vector.load %arg3[%c0_91, %c3712_92] : memref<1x4096xf32, #tpu.memory_space<vmem>>, vector<1x128xf32>
    %151 = vector.broadcast %150 : vector<1x128xf32> to vector<128x128xf32>
    %152 = arith.mulf %149, %151 : vector<128x128xf32>
    %153 = arith.addf %148, %152 : vector<128x128xf32>
    %c0_93 = arith.constant 0 : index
    %c3840 = arith.constant 3840 : index
    %154 = vector.load %arg2[%c0_93, %c3840] : memref<128x4096xf32, #tpu.memory_space<vmem>>, vector<128x128xf32>
    %c0_94 = arith.constant 0 : index
    %c3840_95 = arith.constant 3840 : index
    %155 = vector.load %arg3[%c0_94, %c3840_95] : memref<1x4096xf32, #tpu.memory_space<vmem>>, vector<1x128xf32>
    %156 = vector.broadcast %155 : vector<1x128xf32> to vector<128x128xf32>
    %157 = arith.mulf %154, %156 : vector<128x128xf32>
    %158 = arith.addf %153, %157 : vector<128x128xf32>
    %c0_96 = arith.constant 0 : index
    %c3968 = arith.constant 3968 : index
    %159 = vector.load %arg2[%c0_96, %c3968] : memref<128x4096xf32, #tpu.memory_space<vmem>>, vector<128x128xf32>
    %c0_97 = arith.constant 0 : index
    %c3968_98 = arith.constant 3968 : index
    %160 = vector.load %arg3[%c0_97, %c3968_98] : memref<1x4096xf32, #tpu.memory_space<vmem>>, vector<1x128xf32>
    %161 = vector.broadcast %160 : vector<1x128xf32> to vector<128x128xf32>
    %162 = arith.mulf %159, %161 : vector<128x128xf32>
    %163 = arith.addf %158, %162 : vector<128x128xf32>
    %c0_99 = arith.constant 0 : index
    %c0_100 = arith.constant 0 : index
    %164 = vector.load %arg5[%c0_99, %c0_100] : memref<128x128xf32, #tpu.memory_space<vmem>>, vector<128x128xf32>
    tpu.vector_store %arg5[%c0_99, %c0_100], %163 {strides = array<i32>} : memref<128x128xf32, #tpu.memory_space<vmem>>, vector<128x128xf32>,
    %c0_i32_101 = arith.constant 0 : i32
    %165 = arith.cmpi eq, %arg1, %c0_i32_101 : i32
    %166 = arith.extui %165 : i1 to i32
    %c0_i32_102 = arith.constant 0 : i32
    %167 = arith.cmpi ne, %166, %c0_i32_102 : i32
    scf.if %167 {
      %c0_103 = arith.constant 0 : index
      %c0_104 = arith.constant 0 : index
      %168 = vector.load %arg5[%c0_103, %c0_104] : memref<128x128xf32, #tpu.memory_space<vmem>>, vector<128x128xf32>
      %cst = arith.constant dense<0.000000e+00> : vector<128xf32>
      %169 = vector.multi_reduction <add>, %168, %cst [1] : vector<128x128xf32> to vector<128xf32>
      %170 = vector.shape_cast %169 : vector<128xf32> to vector<128x1xf32>
      %c0_105 = arith.constant 0 : index
      %c0_106 = arith.constant 0 : index
      %171 = vector.load %arg4[%c0_105, %c0_106] : memref<128x1xf32, #tpu.memory_space<vmem>>, vector<128x1xf32>
      tpu.vector_store %arg4[%c0_105, %c0_106], %170 {strides = array<i32>} : memref<128x1xf32, #tpu.memory_space<vmem>>, vector<128x1xf32>,
    } else {
    }
    return
  }
  func.func @transform_0(%arg0: i32, %arg1: i32) -> (i32, i32) {
    %c0_i32 = arith.constant 0 : i32
    return %arg0, %arg1 : i32, i32
  }
  func.func @transform_1(%arg0: i32, %arg1: i32) -> (i32, i32) {
    %c0_i32 = arith.constant 0 : i32
    %c0_i32_0 = arith.constant 0 : i32
    return %c0_i32, %arg1 : i32, i32
  }
  func.func @transform_2(%arg0: i32, %arg1: i32) -> (i32, i32) {
    %c0_i32 = arith.constant 0 : i32
    %c0_i32_0 = arith.constant 0 : i32
    return %arg0, %c0_i32 : i32, i32
  }
}

</mosaic_0001>

<llo_original>
// kernel: tpu_custom_call.1
$region0: #{tpu_custom_call.1}
  #allocation0 [shape = 'u32[]', space=smem, size = 0x4, offset = 0x4, fixed_abs, tag = 'smem constant byte address 0x4 - core index']
  #allocation1 [shape = 'u32[144,128]{1,0:T(1,128)}', space=vmem, size = 0x12000, scoped, tag = 'internal scratch']
  #allocation2 [shape = 'f32[128,128]{1,0:T(8,128)}', space=vmem, size = 0x10000, scoped, tag = 'scratch operand']
  %s0 = inlined_call_operand.hbm [shape: f32[256,4096], index: 0, kind: input, shape index: {}]
  %s1 = inlined_call_operand.hbm [shape: f32[1,4096], index: 1, kind: input, shape index: {}]
  %s2 = inlined_call_operand.vmem [shape: f32[256,1], index: 2, kind: output, shape index: {}]
  %s3 = sld [smem:[#allocation0]]
  $region57: #{tpu_custom_call.1} parent=0
    _
  %s5 = ssub.s32 1, %s3
  %s6 = scalar_select 0, %s5, %s3
  $region1: #{tpu_custom_call.1} parent=0
    #allocation3 [shape = 'u8[4194304]{0}', space=vmem, size = 0x400000, scoped, tag = 'input window, operand 0']
    #allocation4 [shape = 's32[2]{0}', space=sflag, size = 0x8, scoped, tag = 'scoped memory for tpu_custom_call.1']
    #allocation5 [shape = 'u8[16384]{0}', space=vmem, size = 0x4000, scoped, tag = 'input window, operand 1, single buffered']
    #allocation6 [shape = 's32[1]{0}', space=sflag, size = 0x4, scoped, tag = 'scoped memory for tpu_custom_call.1']
    %7 = vsyncpa [#allocation4], 0
    %s8 = scalar_lea.sflag [#allocation4], 1
    %9 = vsyncpa %s8, 0
    %10 = vsyncpa [#allocation6], 0
    loop: start=0, step=1, limit=4
    $region2: #{tpu_custom_call.1} parent=1 // loop_pre_header
      _
    $region3: #{tpu_custom_call.1} parent=1 // loop_header
      %s12 = sphi 0, %s16
      %p13 = scmp.ge.s32.totalorder %s12, 4
      %s19 = sphi 0, %s31
      %s20 = sphi 0, %s27
      %s21 = sphi 0, %s19
      %s22 = sphi 0, %s20
      %s23 = sphi 0, %s21
      %s24 = sphi 0, %s22
      %s36 = sphi 0, %s38
      %s39 = sphi 0, %s36
      %s40 = sphi 0, %s39
      %s56 = sphi 0, %s40
      %s62 = sphi 0, %s64
      %s65 = sphi 0, %s62
      %s66 = sphi 0, %s65
      %s82 = sphi 0, %s66
      %s88 = sphi 0, %s90
      %s91 = sphi 0, %s88
      %s92 = sphi 0, %s91
      %s108 = sphi 0, %s92
    $region4: #{tpu_custom_call.1} parent=1 // loop_header_branch
      %15 = sbr.rel (%p13) target = $region8
    $region5: #{tpu_custom_call.1} parent=1 // loop_body
      %s17 = ssub.s32 %s12, 1
      %s18 = ssub.s32 %s12, 2
      %s25 = sadd.s32 1, %s20
      %p26 = scmp.ge.s32.totalorder %s25, 1
      %s27 = scalar_select %p26, 0, %s25
      %s28 = sadd.s32 1, %s19
      %s29 = scalar_select %p26, %s28, %s19
      %p30 = scmp.ge.s32.totalorder %s29, 2
      %s31 = scalar_select %p30, 0, %s29
      %s32 = ssub.s32 %s19, %s31
      %s33 = ssub.s32 %s20, %s27
      %s34 = sor.u32 %s32, %s33
      %p35 = scmp.eq.s32.totalorder %s34, 0
      %s37 = sadd.s32 %s36, 1
      %s38 = scalar_select %p35, %s36, %s37
      %p41 = pneg %p35
      %p42 = scmp.eq.s32.totalorder %s12, 1
      %p43 = por %p41, %p42
      %p44 = scmp.ne.s32.totalorder %s36, %s39
      %p45 = scmp.eq.s32.totalorder %s12, 0
      %p46 = por %p44, %p45
      %p47 = scmp.ne.s32.totalorder %s36, %s39
      %p48 = scmp.eq.s32.totalorder %s17, 1
      %p49 = por %p47, %p48
      %p50 = scmp.ne.s32.totalorder %s39, %s40
      %p51 = scmp.eq.s32.totalorder %s17, 0
      %p52 = por %p50, %p51
      %p53 = scmp.ne.s32.totalorder %s39, %s40
      %p54 = scmp.eq.s32.totalorder %s18, 1
      %p55 = por %p53, %p54
      %p57 = scmp.ne.s32.totalorder %s40, %s56
      %p58 = scmp.eq.s32.totalorder %s18, 0
      %p59 = por %p57, %p58
      %s60 = ssub.s32 %s20, %s27
      %p61 = scmp.eq.s32.totalorder %s60, 0
      %s63 = sadd.s32 %s62, 1
      %s64 = scalar_select %p61, %s62, %s63
      %p67 = pneg %p61
      %p68 = scmp.eq.s32.totalorder %s12, 1
      %p69 = por %p67, %p68
      %p70 = scmp.ne.s32.totalorder %s62, %s65
      %p71 = scmp.eq.s32.totalorder %s12, 0
      %p72 = por %p70, %p71
      %p73 = scmp.ne.s32.totalorder %s62, %s65
      %p74 = scmp.eq.s32.totalorder %s17, 1
      %p75 = por %p73, %p74
      %p76 = scmp.ne.s32.totalorder %s65, %s66
      %p77 = scmp.eq.s32.totalorder %s17, 0
      %p78 = por %p76, %p77
      %p79 = scmp.ne.s32.totalorder %s65, %s66
      %p80 = scmp.eq.s32.totalorder %s18, 1
      %p81 = por %p79, %p80
      %p83 = scmp.ne.s32.totalorder %s66, %s82
      %p84 = scmp.eq.s32.totalorder %s18, 0
      %p85 = por %p83, %p84
      %s86 = ssub.s32 %s19, %s31
      %p87 = scmp.eq.s32.totalorder %s86, 0
      %s89 = sadd.s32 %s88, 1
      %s90 = scalar_select %p87, %s88, %s89
      %p93 = pneg %p87
      %p94 = scmp.eq.s32.totalorder %s12, 1
      %p95 = por %p93, %p94
      %p96 = scmp.ne.s32.totalorder %s88, %s91
      %p97 = scmp.eq.s32.totalorder %s12, 0
      %p98 = por %p96, %p97
      %p99 = scmp.ne.s32.totalorder %s88, %s91
      %p100 = scmp.eq.s32.totalorder %s17, 1
      %p101 = por %p99, %p100
      %p102 = scmp.ne.s32.totalorder %s91, %s92
      %p103 = scmp.eq.s32.totalorder %s17, 0
      %p104 = por %p102, %p103
      %p105 = scmp.ne.s32.totalorder %s91, %s92
      %p106 = scmp.eq.s32.totalorder %s18, 1
      %p107 = por %p105, %p106
      %p109 = scmp.ne.s32.totalorder %s92, %s108
      %p110 = scmp.eq.s32.totalorder %s18, 0
      %p111 = por %p109, %p110
      %p112 = scmp.le.s32.totalorder 1, %s12
      %p113 = scmp.lt.s32.totalorder %s12, 3
      %p114 = pnand %p112, %p113
      %p115 = pneg %p114
      // Predicated region
      $region9: #{tpu_custom_call.1} parent=5 // pred_check
        _
      $region10: #{tpu_custom_call.1} parent=5 // pred_check_branch
        %117 = sbr.rel (%p114) target = $region12
      $region11: #{tpu_custom_call.1} parent=5 // pred_region
        %s118 = ssub.s32 %s12, 1
        // Predicated region
        $region13: #{tpu_custom_call.1} parent=11 // pred_check
          %p119 = pneg %p78
        $region14: #{tpu_custom_call.1} parent=11 // pred_check_branch
          %121 = sbr.rel (%p119) target = $region16
        $region15: #{tpu_custom_call.1} parent=11 // pred_region
          %s122 = smul.u32 32, %s22
          %s124 = ssub.s32 512, 512
          %125 = vsyncadd [#allocation6], %s124
          %s126 = smul.addr %s122, 16
          %s127 = scalar_lea.hbm %s1, %s126
          %s129 = sshll.u32 [#allocation5], 4
          %s130 = int_to_ptr.vmem [resolvable:$true] %s129
          %132 = dma.hbm_to_vmem [thread:$0]  %s127, 512, %s130, [#allocation6]
        $region16: #{tpu_custom_call.1} parent=11 // pred_fallthru
          _
      $region12: #{tpu_custom_call.1} parent=5 // pred_fallthru
        _
      %p133 = scmp.lt.s32.totalorder %s12, 2
      // Predicated region
      $region17: #{tpu_custom_call.1} parent=5 // pred_check
        %p134 = pneg %p133
      $region18: #{tpu_custom_call.1} parent=5 // pred_check_branch
        %136 = sbr.rel (%p134) target = $region20
      $region19: #{tpu_custom_call.1} parent=5 // pred_region
        // Predicated region
        $region21: #{tpu_custom_call.1} parent=19 // pred_check
          %p137 = pneg %p46
        $region22: #{tpu_custom_call.1} parent=19 // pred_check_branch
          %139 = sbr.rel (%p137) target = $region24
        $region23: #{tpu_custom_call.1} parent=19 // pred_region
          %s140 = sand.u32 %s36, 1
          %s141 = scalar_lea.sflag [#allocation4], %s140
          %s142 = sand.u32 %s36, 1
          %s143 = smul.addr %s142, 4096
          %s144 = scalar_lea.vmem [#allocation3], %s143
          %s145 = smul.u32 16, %s19
          %s146 = smul.u32 32, %s20
          %s148 = ssub.s32 65536, 65536
          %149 = vsyncadd %s141, %s148
          %s150 = smul.addr %s145, 32
          %s151 = sadd.s32 %s146, %s150
          %s152 = smul.addr %s151, 128
          %s153 = scalar_lea.hbm %s0, %s152
          %s154 = sshll.u32 %s144, 4
          %s155 = int_to_ptr.vmem [resolvable:$true] %s154
          %160 = dma.hbm_to_vmem [thread:$0]  %s153, 65536, %s155, %s141, 4096, 4096, 256
        $region24: #{tpu_custom_call.1} parent=19 // pred_fallthru
          _
      $region20: #{tpu_custom_call.1} parent=5 // pred_fallthru
        _
      %p161 = scmp.le.s32.totalorder 1, %s12
      %p162 = scmp.lt.s32.totalorder %s12, 3
      %p163 = pnand %p161, %p162
      %p164 = pneg %p163
      // Predicated region
      $region25: #{tpu_custom_call.1} parent=5 // pred_check
        _
      $region26: #{tpu_custom_call.1} parent=5 // pred_check_branch
        %166 = sbr.rel (%p163) target = $region28
      $region27: #{tpu_custom_call.1} parent=5 // pred_region
        %s167 = ssub.s32 %s12, 1
        %s168 = sand.u32 %s39, 1
        %s169 = scalar_lea.sflag [#allocation4], %s168
        %s170 = sand.u32 %s39, 1
        %s171 = smul.addr %s170, 4096
        %s172 = scalar_lea.vmem [#allocation3], %s171
        // Predicated region
        $region29: #{tpu_custom_call.1} parent=27 // pred_check
          %p173 = pneg %p52
        $region30: #{tpu_custom_call.1} parent=27 // pred_check_branch
          %175 = sbr.rel (%p173) target = $region32
        $region31: #{tpu_custom_call.1} parent=27 // pred_region
          %176 = dma.done %s169, 65536
        $region32: #{tpu_custom_call.1} parent=27 // pred_fallthru
          _
        // Predicated region
        $region33: #{tpu_custom_call.1} parent=27 // pred_check
          %p177 = pneg %p78
        $region34: #{tpu_custom_call.1} parent=27 // pred_check_branch
          %179 = sbr.rel (%p177) target = $region36
        $region35: #{tpu_custom_call.1} parent=27 // pred_region
          %180 = dma.done [#allocation6], 512
        $region36: #{tpu_custom_call.1} parent=27 // pred_fallthru
          _
        %s181 = sand.u32 %s39, 1
        %s182 = scalar_lea.sflag [#allocation4], %s181
        %s183 = sand.u32 %s39, 1
        %s184 = smul.addr %s183, 4096
        %s185 = scalar_lea.vmem [#allocation3], %s184
        %p186 = pneg %p52
        %p187 = pneg %p49
        %p188 = pneg %p78
        %p189 = pneg %p75
        %p190 = pneg %p104
        %p191 = pneg %p101
        %s192 = smul.u32 16, %s21
        %p193 = scmp.lt.s32.totalorder %s192, 31
        %s194 = scalar_select %p193, %s192, 31
        %s195 = smul.addr %s194, 8
        %s196 = scalar_lea.vmem %s2, %s195
        %s197 = smul.u32 16, %s21
        %s198 = smul.u32 32, %s22
        %s199 = smul.u32 32, %s22
        %s200 = smul.u32 16, %s21
        %p201 = scmp.lt.s32.totalorder %s200, 31
        %s202 = scalar_select %p201, %s200, 31
        %s203 = smul.addr %s202, 8
        %s204 = scalar_lea.vmem %s2, %s203
        %s205 = smul.u32 16, %s21
        %p206 = scmp.eq.s32.totalorder %s22, 0
        // Predicated region
        $region37: #{tpu_custom_call.1} parent=27 // pred_check
          %p207 = pneg %p206
        $region38: #{tpu_custom_call.1} parent=27 // pred_check_branch
          %209 = sbr.rel (%p207) target = $region40
        $region39: #{tpu_custom_call.1} parent=27 // pred_region
          %210 = vst [vmem:[#allocation2] sm:$0xff] 0.0
          %211 = vst [vmem:[#allocation2 + $0x8] sm:$0xff] 0.0
          %212 = vst [vmem:[#allocation2 + $0x10] sm:$0xff] 0.0
          %213 = vst [vmem:[#allocation2 + $0x18] sm:$0xff] 0.0
          %214 = vst [vmem:[#allocation2 + $0x20] sm:$0xff] 0.0
          %215 = vst [vmem:[#allocation2 + $0x28] sm:$0xff] 0.0
          %216 = vst [vmem:[#allocation2 + $0x30] sm:$0xff] 0.0
          %217 = vst [vmem:[#allocation2 + $0x38] sm:$0xff] 0.0
          %218 = vst [vmem:[#allocation2 + $0x40] sm:$0xff] 0.0
          %219 = vst [vmem:[#allocation2 + $0x48] sm:$0xff] 0.0
          %220 = vst [vmem:[#allocation2 + $0x50] sm:$0xff] 0.0
          %221 = vst [vmem:[#allocation2 + $0x58] sm:$0xff] 0.0
          %222 = vst [vmem:[#allocation2 + $0x60] sm:$0xff] 0.0
          %223 = vst [vmem:[#allocation2 + $0x68] sm:$0xff] 0.0
          %224 = vst [vmem:[#allocation2 + $0x70] sm:$0xff] 0.0
          %225 = vst [vmem:[#allocation2 + $0x78] sm:$0xff] 0.0
        $region40: #{tpu_custom_call.1} parent=27 // pred_fallthru
          _
        %v226 = vld [vmem:[#allocation2] sm:$0xff]
        %v227 = vld [vmem:[#allocation2 + $0x8] sm:$0xff]
        %v228 = vld [vmem:[#allocation2 + $0x10] sm:$0xff]
        %v229 = vld [vmem:[#allocation2 + $0x18] sm:$0xff]
        %v230 = vld [vmem:[#allocation2 + $0x20] sm:$0xff]
        %v231 = vld [vmem:[#allocation2 + $0x28] sm:$0xff]
        %v232 = vld [vmem:[#allocation2 + $0x30] sm:$0xff]
        %v233 = vld [vmem:[#allocation2 + $0x38] sm:$0xff]
        %v234 = vld [vmem:[#allocation2 + $0x40] sm:$0xff]
        %v235 = vld [vmem:[#allocation2 + $0x48] sm:$0xff]
        %v236 = vld [vmem:[#allocation2 + $0x50] sm:$0xff]
        %v237 = vld [vmem:[#allocation2 + $0x58] sm:$0xff]
        %v238 = vld [vmem:[#allocation2 + $0x60] sm:$0xff]
        %v239 = vld [vmem:[#allocation2 + $0x68] sm:$0xff]
        %v240 = vld [vmem:[#allocation2 + $0x70] sm:$0xff]
        %v241 = vld [vmem:[#allocation2 + $0x78] sm:$0xff]
        %v242 = vld [vmem:[%s172] sm:$0xff]
        %v243 = vld [vmem:[%s172 + $0x100] sm:$0xff]
        %v244 = vld [vmem:[%s172 + $0x200] sm:$0xff]
        %v245 = vld [vmem:[%s172 + $0x300] sm:$0xff]
        %v246 = vld [vmem:[%s172 + $0x400] sm:$0xff]
        %v247 = vld [vmem:[%s172 + $0x500] sm:$0xff]
        %v248 = vld [vmem:[%s172 + $0x600] sm:$0xff]
        %v249 = vld [vmem:[%s172 + $0x700] sm:$0xff]
        %v250 = vld [vmem:[%s172 + $0x800] sm:$0xff]
        %v251 = vld [vmem:[%s172 + $0x900] sm:$0xff]
        %v252 = vld [vmem:[%s172 + $0xa00] sm:$0xff]
        %v253 = vld [vmem:[%s172 + $0xb00] sm:$0xff]
        %v254 = vld [vmem:[%s172 + $0xc00] sm:$0xff]
        %v255 = vld [vmem:[%s172 + $0xd00] sm:$0xff]
        %v256 = vld [vmem:[%s172 + $0xe00] sm:$0xff]
        %v257 = vld [vmem:[%s172 + $0xf00] sm:$0xff]
        %v258 = vld [vmem:[#allocation5] sm:$0x1]
        %v260 = vlaneseq
        %v261 = vshrl.u32 %v260, 7
        %v262 = vsub.s32 0, %v261
        %v263 = vrot.slane %v258, %v262
        %v265 = vmul.f32 %v242, %v263
        %v266 = vmul.f32 %v243, %v263
        %v267 = vmul.f32 %v244, %v263
        %v268 = vmul.f32 %v245, %v263
        %v269 = vmul.f32 %v246, %v263
        %v270 = vmul.f32 %v247, %v263
        %v271 = vmul.f32 %v248, %v263
        %v272 = vmul.f32 %v249, %v263
        %v273 = vmul.f32 %v250, %v263
        %v274 = vmul.f32 %v251, %v263
        %v275 = vmul.f32 %v252, %v263
        %v276 = vmul.f32 %v253, %v263
        %v277 = vmul.f32 %v254, %v263
        %v278 = vmul.f32 %v255, %v263
        %v279 = vmul.f32 %v256, %v263
        %v280 = vmul.f32 %v257, %v263
        %v281 = vadd.f32 %v226, %v265
        %v282 = vadd.f32 %v227, %v266
        %v283 = vadd.f32 %v228, %v267
        %v284 = vadd.f32 %v229, %v268
        %v285 = vadd.f32 %v230, %v269
        %v286 = vadd.f32 %v231, %v270
        %v287 = vadd.f32 %v232, %v271
        %v288 = vadd.f32 %v233, %v272
        %v289 = vadd.f32 %v234, %v273
        %v290 = vadd.f32 %v235, %v274
        %v291 = vadd.f32 %v236, %v275
        %v292 = vadd.f32 %v237, %v276
        %v293 = vadd.f32 %v238, %v277
        %v294 = vadd.f32 %v239, %v278
        %v295 = vadd.f32 %v240, %v279
        %v296 = vadd.f32 %v241, %v280
        %v297 = vld [vmem:[%s172 + $0x8] sm:$0xff]
        %v298 = vld [vmem:[%s172 + $0x108] sm:$0xff]
        %v299 = vld [vmem:[%s172 + $0x208] sm:$0xff]
        %v300 = vld [vmem:[%s172 + $0x308] sm:$0xff]
        %v301 = vld [vmem:[%s172 + $0x408] sm:$0xff]
        %v302 = vld [vmem:[%s172 + $0x508] sm:$0xff]
        %v303 = vld [vmem:[%s172 + $0x608] sm:$0xff]
        %v304 = vld [vmem:[%s172 + $0x708] sm:$0xff]
        %v305 = vld [vmem:[%s172 + $0x808] sm:$0xff]
        %v306 = vld [vmem:[%s172 + $0x908] sm:$0xff]
        %v307 = vld [vmem:[%s172 + $0xa08] sm:$0xff]
        %v308 = vld [vmem:[%s172 + $0xb08] sm:$0xff]
        %v309 = vld [vmem:[%s172 + $0xc08] sm:$0xff]
        %v310 = vld [vmem:[%s172 + $0xd08] sm:$0xff]
        %v311 = vld [vmem:[%s172 + $0xe08] sm:$0xff]
        %v312 = vld [vmem:[%s172 + $0xf08] sm:$0xff]
        %v313 = vld [vmem:[#allocation5 + $0x1] sm:$0x1]
        %v315 = vlaneseq
        %v316 = vshrl.u32 %v315, 7
        %v317 = vsub.s32 0, %v316
        %v318 = vrot.slane %v313, %v317
        %v320 = vmul.f32 %v297, %v318
        %v321 = vmul.f32 %v298, %v318
        %v322 = vmul.f32 %v299, %v318
        %v323 = vmul.f32 %v300, %v318
        %v324 = vmul.f32 %v301, %v318
        %v325 = vmul.f32 %v302, %v318
        %v326 = vmul.f32 %v303, %v318
        %v327 = vmul.f32 %v304, %v318
        %v328 = vmul.f32 %v305, %v318
        %v329 = vmul.f32 %v306, %v318
        %v330 = vmul.f32 %v307, %v318
        %v331 = vmul.f32 %v308, %v318
        %v332 = vmul.f32 %v309, %v318
        %v333 = vmul.f32 %v310, %v318
        %v334 = vmul.f32 %v311, %v318
        %v335 = vmul.f32 %v312, %v318
        %v336 = vadd.f32 %v281, %v320
        %v337 = vadd.f32 %v282, %v321
        %v338 = vadd.f32 %v283, %v322
        %v339 = vadd.f32 %v284, %v323
        %v340 = vadd.f32 %v285, %v324
        %v341 = vadd.f32 %v286, %v325
        %v342 = vadd.f32 %v287, %v326
        %v343 = vadd.f32 %v288, %v327
        %v344 = vadd.f32 %v289, %v328
        %v345 = vadd.f32 %v290, %v329
        %v346 = vadd.f32 %v291, %v330
        %v347 = vadd.f32 %v292, %v331
        %v348 = vadd.f32 %v293, %v332
        %v349 = vadd.f32 %v294, %v333
        %v350 = vadd.f32 %v295, %v334
        %v351 = vadd.f32 %v296, %v335
        %v352 = vld [vmem:[%s172 + $0x10] sm:$0xff]
        %v353 = vld [vmem:[%s172 + $0x110] sm:$0xff]
        %v354 = vld [vmem:[%s172 + $0x210] sm:$0xff]
        %v355 = vld [vmem:[%s172 + $0x310] sm:$0xff]
        %v356 = vld [vmem:[%s172 + $0x410] sm:$0xff]
        %v357 = vld [vmem:[%s172 + $0x510] sm:$0xff]
        %v358 = vld [vmem:[%s172 + $0x610] sm:$0xff]
        %v359 = vld [vmem:[%s172 + $0x710] sm:$0xff]
        %v360 = vld [vmem:[%s172 + $0x810] sm:$0xff]
        %v361 = vld [vmem:[%s172 + $0x910] sm:$0xff]
        %v362 = vld [vmem:[%s172 + $0xa10] sm:$0xff]
        %v363 = vld [vmem:[%s172 + $0xb10] sm:$0xff]
        %v364 = vld [vmem:[%s172 + $0xc10] sm:$0xff]
        %v365 = vld [vmem:[%s172 + $0xd10] sm:$0xff]
        %v366 = vld [vmem:[%s172 + $0xe10] sm:$0xff]
        %v367 = vld [vmem:[%s172 + $0xf10] sm:$0xff]
        %v368 = vld [vmem:[#allocation5 + $0x2] sm:$0x1]
        %v370 = vlaneseq
        %v371 = vshrl.u32 %v370, 7
        %v372 = vsub.s32 0, %v371
        %v373 = vrot.slane %v368, %v372
        %v375 = vmul.f32 %v352, %v373
        %v376 = vmul.f32 %v353, %v373
        %v377 = vmul.f32 %v354, %v373
        %v378 = vmul.f32 %v355, %v373
        %v379 = vmul.f32 %v356, %v373
        %v380 = vmul.f32 %v357, %v373
        %v381 = vmul.f32 %v358, %v373
        %v382 = vmul.f32 %v359, %v373
        %v383 = vmul.f32 %v360, %v373
        %v384 = vmul.f32 %v361, %v373
        %v385 = vmul.f32 %v362, %v373
        %v386 = vmul.f32 %v363, %v373
        %v387 = vmul.f32 %v364, %v373
        %v388 = vmul.f32 %v365, %v373
        %v389 = vmul.f32 %v366, %v373
        %v390 = vmul.f32 %v367, %v373
        %v391 = vadd.f32 %v336, %v375
        %v392 = vadd.f32 %v337, %v376
        %v393 = vadd.f32 %v338, %v377
        %v394 = vadd.f32 %v339, %v378
        %v395 = vadd.f32 %v340, %v379
        %v396 = vadd.f32 %v341, %v380
        %v397 = vadd.f32 %v342, %v381
        %v398 = vadd.f32 %v343, %v382
        %v399 = vadd.f32 %v344, %v383
        %v400 = vadd.f32 %v345, %v384
        %v401 = vadd.f32 %v346, %v385
        %v402 = vadd.f32 %v347, %v386
        %v403 = vadd.f32 %v348, %v387
        %v404 = vadd.f32 %v349, %v388
        %v405 = vadd.f32 %v350, %v389
        %v406 = vadd.f32 %v351, %v390
        %v407 = vld [vmem:[%s172 + $0x18] sm:$0xff]
        %v408 = vld [vmem:[%s172 + $0x118] sm:$0xff]
        %v409 = vld [vmem:[%s172 + $0x218] sm:$0xff]
        %v410 = vld [vmem:[%s172 + $0x318] sm:$0xff]
        %v411 = vld [vmem:[%s172 + $0x418] sm:$0xff]
        %v412 = vld [vmem:[%s172 + $0x518] sm:$0xff]
        %v413 = vld [vmem:[%s172 + $0x618] sm:$0xff]
        %v414 = vld [vmem:[%s172 + $0x718] sm:$0xff]
        %v415 = vld [vmem:[%s172 + $0x818] sm:$0xff]
        %v416 = vld [vmem:[%s172 + $0x918] sm:$0xff]
        %v417 = vld [vmem:[%s172 + $0xa18] sm:$0xff]
        %v418 = vld [vmem:[%s172 + $0xb18] sm:$0xff]
        %v419 = vld [vmem:[%s172 + $0xc18] sm:$0xff]
        %v420 = vld [vmem:[%s172 + $0xd18] sm:$0xff]
        %v421 = vld [vmem:[%s172 + $0xe18] sm:$0xff]
        %v422 = vld [vmem:[%s172 + $0xf18] sm:$0xff]
        %v423 = vld [vmem:[#allocation5 + $0x3] sm:$0x1]
        %v425 = vlaneseq
        %v426 = vshrl.u32 %v425, 7
        %v427 = vsub.s32 0, %v426
        %v428 = vrot.slane %v423, %v427
        %v430 = vmul.f32 %v407, %v428
        %v431 = vmul.f32 %v408, %v428
        %v432 = vmul.f32 %v409, %v428
        %v433 = vmul.f32 %v410, %v428
        %v434 = vmul.f32 %v411, %v428
        %v435 = vmul.f32 %v412, %v428
        %v436 = vmul.f32 %v413, %v428
        %v437 = vmul.f32 %v414, %v428
        %v438 = vmul.f32 %v415, %v428
        %v439 = vmul.f32 %v416, %v428
        %v440 = vmul.f32 %v417, %v428
        %v441 = vmul.f32 %v418, %v428
        %v442 = vmul.f32 %v419, %v428
        %v443 = vmul.f32 %v420, %v428
        %v444 = vmul.f32 %v421, %v428
        %v445 = vmul.f32 %v422, %v428
        %v446 = vadd.f32 %v391, %v430
        %v447 = vadd.f32 %v392, %v431
        %v448 = vadd.f32 %v393, %v432
        %v449 = vadd.f32 %v394, %v433
        %v450 = vadd.f32 %v395, %v434
        %v451 = vadd.f32 %v396, %v435
        %v452 = vadd.f32 %v397, %v436
        %v453 = vadd.f32 %v398, %v437
        %v454 = vadd.f32 %v399, %v438
        %v455 = vadd.f32 %v400, %v439
        %v456 = vadd.f32 %v401, %v440
        %v457 = vadd.f32 %v402, %v441
        %v458 = vadd.f32 %v403, %v442
        %v459 = vadd.f32 %v404, %v443
        %v460 = vadd.f32 %v405, %v444
        %v461 = vadd.f32 %v406, %v445
        %v462 = vld [vmem:[%s172 + $0x20] sm:$0xff]
        %v463 = vld [vmem:[%s172 + $0x120] sm:$0xff]
        %v464 = vld [vmem:[%s172 + $0x220] sm:$0xff]
        %v465 = vld [vmem:[%s172 + $0x320] sm:$0xff]
        %v466 = vld [vmem:[%s172 + $0x420] sm:$0xff]
        %v467 = vld [vmem:[%s172 + $0x520] sm:$0xff]
        %v468 = vld [vmem:[%s172 + $0x620] sm:$0xff]
        %v469 = vld [vmem:[%s172 + $0x720] sm:$0xff]
        %v470 = vld [vmem:[%s172 + $0x820] sm:$0xff]
        %v471 = vld [vmem:[%s172 + $0x920] sm:$0xff]
        %v472 = vld [vmem:[%s172 + $0xa20] sm:$0xff]
        %v473 = vld [vmem:[%s172 + $0xb20] sm:$0xff]
        %v474 = vld [vmem:[%s172 + $0xc20] sm:$0xff]
        %v475 = vld [vmem:[%s172 + $0xd20] sm:$0xff]
        %v476 = vld [vmem:[%s172 + $0xe20] sm:$0xff]
        %v477 = vld [vmem:[%s172 + $0xf20] sm:$0xff]
        %v478 = vld [vmem:[#allocation5 + $0x4] sm:$0x1]
        %v480 = vlaneseq
        %v481 = vshrl.u32 %v480, 7
        %v482 = vsub.s32 0, %v481
        %v483 = vrot.slane %v478, %v482
        %v485 = vmul.f32 %v462, %v483
        %v486 = vmul.f32 %v463, %v483
        %v487 = vmul.f32 %v464, %v483
        %v488 = vmul.f32 %v465, %v483
        %v489 = vmul.f32 %v466, %v483
        %v490 = vmul.f32 %v467, %v483
        %v491 = vmul.f32 %v468, %v483
        %v492 = vmul.f32 %v469, %v483
        %v493 = vmul.f32 %v470, %v483
        %v494 = vmul.f32 %v471, %v483
        %v495 = vmul.f32 %v472, %v483
        %v496 = vmul.f32 %v473, %v483
        %v497 = vmul.f32 %v474, %v483
        %v498 = vmul.f32 %v475, %v483
        %v499 = vmul.f32 %v476, %v483
        %v500 = vmul.f32 %v477, %v483
        %v501 = vadd.f32 %v446, %v485
        %v502 = vadd.f32 %v447, %v486
        %v503 = vadd.f32 %v448, %v487
        %v504 = vadd.f32 %v449, %v488
        %v505 = vadd.f32 %v450, %v489
        %v506 = vadd.f32 %v451, %v490
        %v507 = vadd.f32 %v452, %v491
        %v508 = vadd.f32 %v453, %v492
        %v509 = vadd.f32 %v454, %v493
        %v510 = vadd.f32 %v455, %v494
        %v511 = vadd.f32 %v456, %v495
        %v512 = vadd.f32 %v457, %v496
        %v513 = vadd.f32 %v458, %v497
        %v514 = vadd.f32 %v459, %v498
        %v515 = vadd.f32 %v460, %v499
        %v516 = vadd.f32 %v461, %v500
        %v517 = vld [vmem:[%s172 + $0x28] sm:$0xff]
        %v518 = vld [vmem:[%s172 + $0x128] sm:$0xff]
        %v519 = vld [vmem:[%s172 + $0x228] sm:$0xff]
        %v520 = vld [vmem:[%s172 + $0x328] sm:$0xff]
        %v521 = vld [vmem:[%s172 + $0x428] sm:$0xff]
        %v522 = vld [vmem:[%s172 + $0x528] sm:$0xff]
        %v523 = vld [vmem:[%s172 + $0x628] sm:$0xff]
        %v524 = vld [vmem:[%s172 + $0x728] sm:$0xff]
        %v525 = vld [vmem:[%s172 + $0x828] sm:$0xff]
        %v526 = vld [vmem:[%s172 + $0x928] sm:$0xff]
        %v527 = vld [vmem:[%s172 + $0xa28] sm:$0xff]
        %v528 = vld [vmem:[%s172 + $0xb28] sm:$0xff]
        %v529 = vld [vmem:[%s172 + $0xc28] sm:$0xff]
        %v530 = vld [vmem:[%s172 + $0xd28] sm:$0xff]
        %v531 = vld [vmem:[%s172 + $0xe28] sm:$0xff]
        %v532 = vld [vmem:[%s172 + $0xf28] sm:$0xff]
        %v533 = vld [vmem:[#allocation5 + $0x5] sm:$0x1]
        %v535 = vlaneseq
        %v536 = vshrl.u32 %v535, 7
        %v537 = vsub.s32 0, %v536
        %v538 = vrot.slane %v533, %v537
        %v540 = vmul.f32 %v517, %v538
        %v541 = vmul.f32 %v518, %v538
        %v542 = vmul.f32 %v519, %v538
        %v543 = vmul.f32 %v520, %v538
        %v544 = vmul.f32 %v521, %v538
        %v545 = vmul.f32 %v522, %v538
        %v546 = vmul.f32 %v523, %v538
        %v547 = vmul.f32 %v524, %v538
        %v548 = vmul.f32 %v525, %v538
        %v549 = vmul.f32 %v526, %v538
        %v550 = vmul.f32 %v527, %v538
        %v551 = vmul.f32 %v528, %v538
        %v552 = vmul.f32 %v529, %v538
        %v553 = vmul.f32 %v530, %v538
        %v554 = vmul.f32 %v531, %v538
        %v555 = vmul.f32 %v532, %v538
        %v556 = vadd.f32 %v501, %v540
        %v557 = vadd.f32 %v502, %v541
        %v558 = vadd.f32 %v503, %v542
        %v559 = vadd.f32 %v504, %v543
        %v560 = vadd.f32 %v505, %v544
        %v561 = vadd.f32 %v506, %v545
        %v562 = vadd.f32 %v507, %v546
        %v563 = vadd.f32 %v508, %v547
        %v564 = vadd.f32 %v509, %v548
        %v565 = vadd.f32 %v510, %v549
        %v566 = vadd.f32 %v511, %v550
        %v567 = vadd.f32 %v512, %v551
        %v568 = vadd.f32 %v513, %v552
        %v569 = vadd.f32 %v514, %v553
        %v570 = vadd.f32 %v515, %v554
        %v571 = vadd.f32 %v516, %v555
        %v572 = vld [vmem:[%s172 + $0x30] sm:$0xff]
        %v573 = vld [vmem:[%s172 + $0x130] sm:$0xff]
        %v574 = vld [vmem:[%s172 + $0x230] sm:$0xff]
        %v575 = vld [vmem:[%s172 + $0x330] sm:$0xff]
        %v576 = vld [vmem:[%s172 + $0x430] sm:$0xff]
        %v577 = vld [vmem:[%s172 + $0x530] sm:$0xff]
        %v578 = vld [vmem:[%s172 + $0x630] sm:$0xff]
        %v579 = vld [vmem:[%s172 + $0x730] sm:$0xff]
        %v580 = vld [vmem:[%s172 + $0x830] sm:$0xff]
        %v581 = vld [vmem:[%s172 + $0x930] sm:$0xff]
        %v582 = vld [vmem:[%s172 + $0xa30] sm:$0xff]
        %v583 = vld [vmem:[%s172 + $0xb30] sm:$0xff]
        %v584 = vld [vmem:[%s172 + $0xc30] sm:$0xff]
        %v585 = vld [vmem:[%s172 + $0xd30] sm:$0xff]
        %v586 = vld [vmem:[%s172 + $0xe30] sm:$0xff]
        %v587 = vld [vmem:[%s172 + $0xf30] sm:$0xff]
        %v588 = vld [vmem:[#allocation5 + $0x6] sm:$0x1]
        %v590 = vlaneseq
        %v591 = vshrl.u32 %v590, 7
        %v592 = vsub.s32 0, %v591
        %v593 = vrot.slane %v588, %v592
        %v595 = vmul.f32 %v572, %v593
        %v596 = vmul.f32 %v573, %v593
        %v597 = vmul.f32 %v574, %v593
        %v598 = vmul.f32 %v575, %v593
        %v599 = vmul.f32 %v576, %v593
        %v600 = vmul.f32 %v577, %v593
        %v601 = vmul.f32 %v578, %v593
        %v602 = vmul.f32 %v579, %v593
        %v603 = vmul.f32 %v580, %v593
        %v604 = vmul.f32 %v581, %v593
        %v605 = vmul.f32 %v582, %v593
        %v606 = vmul.f32 %v583, %v593
        %v607 = vmul.f32 %v584, %v593
        %v608 = vmul.f32 %v585, %v593
        %v609 = vmul.f32 %v586, %v593
        %v610 = vmul.f32 %v587, %v593
        %v611 = vadd.f32 %v556, %v595
        %v612 = vadd.f32 %v557, %v596
        %v613 = vadd.f32 %v558, %v597
        %v614 = vadd.f32 %v559, %v598
        %v615 = vadd.f32 %v560, %v599
        %v616 = vadd.f32 %v561, %v600
        %v617 = vadd.f32 %v562, %v601
        %v618 = vadd.f32 %v563, %v602
        %v619 = vadd.f32 %v564, %v603
        %v620 = vadd.f32 %v565, %v604
        %v621 = vadd.f32 %v566, %v605
        %v622 = vadd.f32 %v567, %v606
        %v623 = vadd.f32 %v568, %v607
        %v624 = vadd.f32 %v569, %v608
        %v625 = vadd.f32 %v570, %v609
        %v626 = vadd.f32 %v571, %v610
        %v627 = vld [vmem:[%s172 + $0x38] sm:$0xff]
        %v628 = vld [vmem:[%s172 + $0x138] sm:$0xff]
        %v629 = vld [vmem:[%s172 + $0x238] sm:$0xff]
        %v630 = vld [vmem:[%s172 + $0x338] sm:$0xff]
        %v631 = vld [vmem:[%s172 + $0x438] sm:$0xff]
        %v632 = vld [vmem:[%s172 + $0x538] sm:$0xff]
        %v633 = vld [vmem:[%s172 + $0x638] sm:$0xff]
        %v634 = vld [vmem:[%s172 + $0x738] sm:$0xff]
        %v635 = vld [vmem:[%s172 + $0x838] sm:$0xff]
        %v636 = vld [vmem:[%s172 + $0x938] sm:$0xff]
        %v637 = vld [vmem:[%s172 + $0xa38] sm:$0xff]
        %v638 = vld [vmem:[%s172 + $0xb38] sm:$0xff]
        %v639 = vld [vmem:[%s172 + $0xc38] sm:$0xff]
        %v640 = vld [vmem:[%s172 + $0xd38] sm:$0xff]
        %v641 = vld [vmem:[%s172 + $0xe38] sm:$0xff]
        %v642 = vld [vmem:[%s172 + $0xf38] sm:$0xff]
        %v643 = vld [vmem:[#allocation5 + $0x7] sm:$0x1]
        %v645 = vlaneseq
        %v646 = vshrl.u32 %v645, 7
        %v647 = vsub.s32 0, %v646
        %v648 = vrot.slane %v643, %v647
        %v650 = vmul.f32 %v627, %v648
        %v651 = vmul.f32 %v628, %v648
        %v652 = vmul.f32 %v629, %v648
        %v653 = vmul.f32 %v630, %v648
        %v654 = vmul.f32 %v631, %v648
        %v655 = vmul.f32 %v632, %v648
        %v656 = vmul.f32 %v633, %v648
        %v657 = vmul.f32 %v634, %v648
        %v658 = vmul.f32 %v635, %v648
        %v659 = vmul.f32 %v636, %v648
        %v660 = vmul.f32 %v637, %v648
        %v661 = vmul.f32 %v638, %v648
        %v662 = vmul.f32 %v639, %v648
        %v663 = vmul.f32 %v640, %v648
        %v664 = vmul.f32 %v641, %v648
        %v665 = vmul.f32 %v642, %v648
        %v666 = vadd.f32 %v611, %v650
        %v667 = vadd.f32 %v612, %v651
        %v668 = vadd.f32 %v613, %v652
        %v669 = vadd.f32 %v614, %v653
        %v670 = vadd.f32 %v615, %v654
        %v671 = vadd.f32 %v616, %v655
        %v672 = vadd.f32 %v617, %v656
        %v673 = vadd.f32 %v618, %v657
        %v674 = vadd.f32 %v619, %v658
        %v675 = vadd.f32 %v620, %v659
        %v676 = vadd.f32 %v621, %v660
        %v677 = vadd.f32 %v622, %v661
        %v678 = vadd.f32 %v623, %v662
        %v679 = vadd.f32 %v624, %v663
        %v680 = vadd.f32 %v625, %v664
        %v681 = vadd.f32 %v626, %v665
        %v682 = vld [vmem:[%s172 + $0x40] sm:$0xff]
        %v683 = vld [vmem:[%s172 + $0x140] sm:$0xff]
        %v684 = vld [vmem:[%s172 + $0x240] sm:$0xff]
        %v685 = vld [vmem:[%s172 + $0x340] sm:$0xff]
        %v686 = vld [vmem:[%s172 + $0x440] sm:$0xff]
        %v687 = vld [vmem:[%s172 + $0x540] sm:$0xff]
        %v688 = vld [vmem:[%s172 + $0x640] sm:$0xff]
        %v689 = vld [vmem:[%s172 + $0x740] sm:$0xff]
        %v690 = vld [vmem:[%s172 + $0x840] sm:$0xff]
        %v691 = vld [vmem:[%s172 + $0x940] sm:$0xff]
        %v692 = vld [vmem:[%s172 + $0xa40] sm:$0xff]
        %v693 = vld [vmem:[%s172 + $0xb40] sm:$0xff]
        %v694 = vld [vmem:[%s172 + $0xc40] sm:$0xff]
        %v695 = vld [vmem:[%s172 + $0xd40] sm:$0xff]
        %v696 = vld [vmem:[%s172 + $0xe40] sm:$0xff]
        %v697 = vld [vmem:[%s172 + $0xf40] sm:$0xff]
        %v698 = vld [vmem:[#allocation5 + $0x8] sm:$0x1]
        %v700 = vlaneseq
        %v701 = vshrl.u32 %v700, 7
        %v702 = vsub.s32 0, %v701
        %v703 = vrot.slane %v698, %v702
        %v705 = vmul.f32 %v682, %v703
        %v706 = vmul.f32 %v683, %v703
        %v707 = vmul.f32 %v684, %v703
        %v708 = vmul.f32 %v685, %v703
        %v709 = vmul.f32 %v686, %v703
        %v710 = vmul.f32 %v687, %v703
        %v711 = vmul.f32 %v688, %v703
        %v712 = vmul.f32 %v689, %v703
        %v713 = vmul.f32 %v690, %v703
        %v714 = vmul.f32 %v691, %v703
        %v715 = vmul.f32 %v692, %v703
        %v716 = vmul.f32 %v693, %v703
        %v717 = vmul.f32 %v694, %v703
        %v718 = vmul.f32 %v695, %v703
        %v719 = vmul.f32 %v696, %v703
        %v720 = vmul.f32 %v697, %v703
        %v721 = vadd.f32 %v666, %v705
        %v722 = vadd.f32 %v667, %v706
        %v723 = vadd.f32 %v668, %v707
        %v724 = vadd.f32 %v669, %v708
        %v725 = vadd.f32 %v670, %v709
        %v726 = vadd.f32 %v671, %v710
        %v727 = vadd.f32 %v672, %v711
        %v728 = vadd.f32 %v673, %v712
        %v729 = vadd.f32 %v674, %v713
        %v730 = vadd.f32 %v675, %v714
        %v731 = vadd.f32 %v676, %v715
        %v732 = vadd.f32 %v677, %v716
        %v733 = vadd.f32 %v678, %v717
        %v734 = vadd.f32 %v679, %v718
        %v735 = vadd.f32 %v680, %v719
        %v736 = vadd.f32 %v681, %v720
        %v737 = vld [vmem:[%s172 + $0x48] sm:$0xff]
        %v738 = vld [vmem:[%s172 + $0x148] sm:$0xff]
        %v739 = vld [vmem:[%s172 + $0x248] sm:$0xff]
        %v740 = vld [vmem:[%s172 + $0x348] sm:$0xff]
        %v741 = vld [vmem:[%s172 + $0x448] sm:$0xff]
        %v742 = vld [vmem:[%s172 + $0x548] sm:$0xff]
        %v743 = vld [vmem:[%s172 + $0x648] sm:$0xff]
        %v744 = vld [vmem:[%s172 + $0x748] sm:$0xff]
        %v745 = vld [vmem:[%s172 + $0x848] sm:$0xff]
        %v746 = vld [vmem:[%s172 + $0x948] sm:$0xff]
        %v747 = vld [vmem:[%s172 + $0xa48] sm:$0xff]
        %v748 = vld [vmem:[%s172 + $0xb48] sm:$0xff]
        %v749 = vld [vmem:[%s172 + $0xc48] sm:$0xff]
        %v750 = vld [vmem:[%s172 + $0xd48] sm:$0xff]
        %v751 = vld [vmem:[%s172 + $0xe48] sm:$0xff]
        %v752 = vld [vmem:[%s172 + $0xf48] sm:$0xff]
        %v753 = vld [vmem:[#allocation5 + $0x9] sm:$0x1]
        %v755 = vlaneseq
        %v756 = vshrl.u32 %v755, 7
        %v757 = vsub.s32 0, %v756
        %v758 = vrot.slane %v753, %v757
        %v760 = vmul.f32 %v737, %v758
        %v761 = vmul.f32 %v738, %v758
        %v762 = vmul.f32 %v739, %v758
        %v763 = vmul.f32 %v740, %v758
        %v764 = vmul.f32 %v741, %v758
        %v765 = vmul.f32 %v742, %v758
        %v766 = vmul.f32 %v743, %v758
        %v767 = vmul.f32 %v744, %v758
        %v768 = vmul.f32 %v745, %v758
        %v769 = vmul.f32 %v746, %v758
        %v770 = vmul.f32 %v747, %v758
        %v771 = vmul.f32 %v748, %v758
        %v772 = vmul.f32 %v749, %v758
        %v773 = vmul.f32 %v750, %v758
        %v774 = vmul.f32 %v751, %v758
        %v775 = vmul.f32 %v752, %v758
        %v776 = vadd.f32 %v721, %v760
        %v777 = vadd.f32 %v722, %v761
        %v778 = vadd.f32 %v723, %v762
        %v779 = vadd.f32 %v724, %v763
        %v780 = vadd.f32 %v725, %v764
        %v781 = vadd.f32 %v726, %v765
        %v782 = vadd.f32 %v727, %v766
        %v783 = vadd.f32 %v728, %v767
        %v784 = vadd.f32 %v729, %v768
        %v785 = vadd.f32 %v730, %v769
        %v786 = vadd.f32 %v731, %v770
        %v787 = vadd.f32 %v732, %v771
        %v788 = vadd.f32 %v733, %v772
        %v789 = vadd.f32 %v734, %v773
        %v790 = vadd.f32 %v735, %v774
        %v791 = vadd.f32 %v736, %v775
        %v792 = vld [vmem:[%s172 + $0x50] sm:$0xff]
        %v793 = vld [vmem:[%s172 + $0x150] sm:$0xff]
        %v794 = vld [vmem:[%s172 + $0x250] sm:$0xff]
        %v795 = vld [vmem:[%s172 + $0x350] sm:$0xff]
        %v796 = vld [vmem:[%s172 + $0x450] sm:$0xff]
        %v797 = vld [vmem:[%s172 + $0x550] sm:$0xff]
        %v798 = vld [vmem:[%s172 + $0x650] sm:$0xff]
        %v799 = vld [vmem:[%s172 + $0x750] sm:$0xff]
        %v800 = vld [vmem:[%s172 + $0x850] sm:$0xff]
        %v801 = vld [vmem:[%s172 + $0x950] sm:$0xff]
        %v802 = vld [vmem:[%s172 + $0xa50] sm:$0xff]
        %v803 = vld [vmem:[%s172 + $0xb50] sm:$0xff]
        %v804 = vld [vmem:[%s172 + $0xc50] sm:$0xff]
        %v805 = vld [vmem:[%s172 + $0xd50] sm:$0xff]
        %v806 = vld [vmem:[%s172 + $0xe50] sm:$0xff]
        %v807 = vld [vmem:[%s172 + $0xf50] sm:$0xff]
        %v808 = vld [vmem:[#allocation5 + $0xa] sm:$0x1]
        %v810 = vlaneseq
        %v811 = vshrl.u32 %v810, 7
        %v812 = vsub.s32 0, %v811
        %v813 = vrot.slane %v808, %v812
        %v815 = vmul.f32 %v792, %v813
        %v816 = vmul.f32 %v793, %v813
        %v817 = vmul.f32 %v794, %v813
        %v818 = vmul.f32 %v795, %v813
        %v819 = vmul.f32 %v796, %v813
        %v820 = vmul.f32 %v797, %v813
        %v821 = vmul.f32 %v798, %v813
        %v822 = vmul.f32 %v799, %v813
        %v823 = vmul.f32 %v800, %v813
        %v824 = vmul.f32 %v801, %v813
        %v825 = vmul.f32 %v802, %v813
        %v826 = vmul.f32 %v803, %v813
        %v827 = vmul.f32 %v804, %v813
        %v828 = vmul.f32 %v805, %v813
        %v829 = vmul.f32 %v806, %v813
        %v830 = vmul.f32 %v807, %v813
        %v831 = vadd.f32 %v776, %v815
        %v832 = vadd.f32 %v777, %v816
        %v833 = vadd.f32 %v778, %v817
        %v834 = vadd.f32 %v779, %v818
        %v835 = vadd.f32 %v780, %v819
        %v836 = vadd.f32 %v781, %v820
        %v837 = vadd.f32 %v782, %v821
        %v838 = vadd.f32 %v783, %v822
        %v839 = vadd.f32 %v784, %v823
        %v840 = vadd.f32 %v785, %v824
        %v841 = vadd.f32 %v786, %v825
        %v842 = vadd.f32 %v787, %v826
        %v843 = vadd.f32 %v788, %v827
        %v844 = vadd.f32 %v789, %v828
        %v845 = vadd.f32 %v790, %v829
        %v846 = vadd.f32 %v791, %v830
        %v847 = vld [vmem:[%s172 + $0x58] sm:$0xff]
        %v848 = vld [vmem:[%s172 + $0x158] sm:$0xff]
        %v849 = vld [vmem:[%s172 + $0x258] sm:$0xff]
        %v850 = vld [vmem:[%s172 + $0x358] sm:$0xff]
        %v851 = vld [vmem:[%s172 + $0x458] sm:$0xff]
        %v852 = vld [vmem:[%s172 + $0x558] sm:$0xff]
        %v853 = vld [vmem:[%s172 + $0x658] sm:$0xff]
        %v854 = vld [vmem:[%s172 + $0x758] sm:$0xff]
        %v855 = vld [vmem:[%s172 + $0x858] sm:$0xff]
        %v856 = vld [vmem:[%s172 + $0x958] sm:$0xff]
        %v857 = vld [vmem:[%s172 + $0xa58] sm:$0xff]
        %v858 = vld [vmem:[%s172 + $0xb58] sm:$0xff]
        %v859 = vld [vmem:[%s172 + $0xc58] sm:$0xff]
        %v860 = vld [vmem:[%s172 + $0xd58] sm:$0xff]
        %v861 = vld [vmem:[%s172 + $0xe58] sm:$0xff]
        %v862 = vld [vmem:[%s172 + $0xf58] sm:$0xff]
        %v863 = vld [vmem:[#allocation5 + $0xb] sm:$0x1]
        %v865 = vlaneseq
        %v866 = vshrl.u32 %v865, 7
        %v867 = vsub.s32 0, %v866
        %v868 = vrot.slane %v863, %v867
        %v870 = vmul.f32 %v847, %v868
        %v871 = vmul.f32 %v848, %v868
        %v872 = vmul.f32 %v849, %v868
        %v873 = vmul.f32 %v850, %v868
        %v874 = vmul.f32 %v851, %v868
        %v875 = vmul.f32 %v852, %v868
        %v876 = vmul.f32 %v853, %v868
        %v877 = vmul.f32 %v854, %v868
        %v878 = vmul.f32 %v855, %v868
        %v879 = vmul.f32 %v856, %v868
        %v880 = vmul.f32 %v857, %v868
        %v881 = vmul.f32 %v858, %v868
        %v882 = vmul.f32 %v859, %v868
        %v883 = vmul.f32 %v860, %v868
        %v884 = vmul.f32 %v861, %v868
        %v885 = vmul.f32 %v862, %v868
        %v886 = vadd.f32 %v831, %v870
        %v887 = vadd.f32 %v832, %v871
        %v888 = vadd.f32 %v833, %v872
        %v889 = vadd.f32 %v834, %v873
        %v890 = vadd.f32 %v835, %v874
        %v891 = vadd.f32 %v836, %v875
        %v892 = vadd.f32 %v837, %v876
        %v893 = vadd.f32 %v838, %v877
        %v894 = vadd.f32 %v839, %v878
        %v895 = vadd.f32 %v840, %v879
        %v896 = vadd.f32 %v841, %v880
        %v897 = vadd.f32 %v842, %v881
        %v898 = vadd.f32 %v843, %v882
        %v899 = vadd.f32 %v844, %v883
        %v900 = vadd.f32 %v845, %v884
        %v901 = vadd.f32 %v846, %v885
        %v902 = vld [vmem:[%s172 + $0x60] sm:$0xff]
        %v903 = vld [vmem:[%s172 + $0x160] sm:$0xff]
        %v904 = vld [vmem:[%s172 + $0x260] sm:$0xff]
        %v905 = vld [vmem:[%s172 + $0x360] sm:$0xff]
        %v906 = vld [vmem:[%s172 + $0x460] sm:$0xff]
        %v907 = vld [vmem:[%s172 + $0x560] sm:$0xff]
        %v908 = vld [vmem:[%s172 + $0x660] sm:$0xff]
        %v909 = vld [vmem:[%s172 + $0x760] sm:$0xff]
        %v910 = vld [vmem:[%s172 + $0x860] sm:$0xff]
        %v911 = vld [vmem:[%s172 + $0x960] sm:$0xff]
        %v912 = vld [vmem:[%s172 + $0xa60] sm:$0xff]
        %v913 = vld [vmem:[%s172 + $0xb60] sm:$0xff]
        %v914 = vld [vmem:[%s172 + $0xc60] sm:$0xff]
        %v915 = vld [vmem:[%s172 + $0xd60] sm:$0xff]
        %v916 = vld [vmem:[%s172 + $0xe60] sm:$0xff]
        %v917 = vld [vmem:[%s172 + $0xf60] sm:$0xff]
        %v918 = vld [vmem:[#allocation5 + $0xc] sm:$0x1]
        %v920 = vlaneseq
        %v921 = vshrl.u32 %v920, 7
        %v922 = vsub.s32 0, %v921
        %v923 = vrot.slane %v918, %v922
        %v925 = vmul.f32 %v902, %v923
        %v926 = vmul.f32 %v903, %v923
        %v927 = vmul.f32 %v904, %v923
        %v928 = vmul.f32 %v905, %v923
        %v929 = vmul.f32 %v906, %v923
        %v930 = vmul.f32 %v907, %v923
        %v931 = vmul.f32 %v908, %v923
        %v932 = vmul.f32 %v909, %v923
        %v933 = vmul.f32 %v910, %v923
        %v934 = vmul.f32 %v911, %v923
        %v935 = vmul.f32 %v912, %v923
        %v936 = vmul.f32 %v913, %v923
        %v937 = vmul.f32 %v914, %v923
        %v938 = vmul.f32 %v915, %v923
        %v939 = vmul.f32 %v916, %v923
        %v940 = vmul.f32 %v917, %v923
        %v941 = vadd.f32 %v886, %v925
        %v942 = vadd.f32 %v887, %v926
        %v943 = vadd.f32 %v888, %v927
        %v944 = vadd.f32 %v889, %v928
        %v945 = vadd.f32 %v890, %v929
        %v946 = vadd.f32 %v891, %v930
        %v947 = vadd.f32 %v892, %v931
        %v948 = vadd.f32 %v893, %v932
        %v949 = vadd.f32 %v894, %v933
        %v950 = vadd.f32 %v895, %v934
        %v951 = vadd.f32 %v896, %v935
        %v952 = vadd.f32 %v897, %v936
        %v953 = vadd.f32 %v898, %v937
        %v954 = vadd.f32 %v899, %v938
        %v955 = vadd.f32 %v900, %v939
        %v956 = vadd.f32 %v901, %v940
        %v957 = vld [vmem:[%s172 + $0x68] sm:$0xff]
        %v958 = vld [vmem:[%s172 + $0x168] sm:$0xff]
        %v959 = vld [vmem:[%s172 + $0x268] sm:$0xff]
        %v960 = vld [vmem:[%s172 + $0x368] sm:$0xff]
        %v961 = vld [vmem:[%s172 + $0x468] sm:$0xff]
        %v962 = vld [vmem:[%s172 + $0x568] sm:$0xff]
        %v963 = vld [vmem:[%s172 + $0x668] sm:$0xff]
        %v964 = vld [vmem:[%s172 + $0x768] sm:$0xff]
        %v965 = vld [vmem:[%s172 + $0x868] sm:$0xff]
        %v966 = vld [vmem:[%s172 + $0x968] sm:$0xff]
        %v967 = vld [vmem:[%s172 + $0xa68] sm:$0xff]
        %v968 = vld [vmem:[%s172 + $0xb68] sm:$0xff]
        %v969 = vld [vmem:[%s172 + $0xc68] sm:$0xff]
        %v970 = vld [vmem:[%s172 + $0xd68] sm:$0xff]
        %v971 = vld [vmem:[%s172 + $0xe68] sm:$0xff]
        %v972 = vld [vmem:[%s172 + $0xf68] sm:$0xff]
        %v973 = vld [vmem:[#allocation5 + $0xd] sm:$0x1]
        %v975 = vlaneseq
        %v976 = vshrl.u32 %v975, 7
        %v977 = vsub.s32 0, %v976
        %v978 = vrot.slane %v973, %v977
        %v980 = vmul.f32 %v957, %v978
        %v981 = vmul.f32 %v958, %v978
        %v982 = vmul.f32 %v959, %v978
        %v983 = vmul.f32 %v960, %v978
        %v984 = vmul.f32 %v961, %v978
        %v985 = vmul.f32 %v962, %v978
        %v986 = vmul.f32 %v963, %v978
        %v987 = vmul.f32 %v964, %v978
        %v988 = vmul.f32 %v965, %v978
        %v989 = vmul.f32 %v966, %v978
        %v990 = vmul.f32 %v967, %v978
        %v991 = vmul.f32 %v968, %v978
        %v992 = vmul.f32 %v969, %v978
        %v993 = vmul.f32 %v970, %v978
        %v994 = vmul.f32 %v971, %v978
        %v995 = vmul.f32 %v972, %v978
        %v996 = vadd.f32 %v941, %v980
        %v997 = vadd.f32 %v942, %v981
        %v998 = vadd.f32 %v943, %v982
        %v999 = vadd.f32 %v944, %v983
        %v1000 = vadd.f32 %v945, %v984
        %v1001 = vadd.f32 %v946, %v985
        %v1002 = vadd.f32 %v947, %v986
        %v1003 = vadd.f32 %v948, %v987
        %v1004 = vadd.f32 %v949, %v988
        %v1005 = vadd.f32 %v950, %v989
        %v1006 = vadd.f32 %v951, %v990
        %v1007 = vadd.f32 %v952, %v991
        %v1008 = vadd.f32 %v953, %v992
        %v1009 = vadd.f32 %v954, %v993
        %v1010 = vadd.f32 %v955, %v994
        %v1011 = vadd.f32 %v956, %v995
        %v1012 = vld [vmem:[%s172 + $0x70] sm:$0xff]
        %v1013 = vld [vmem:[%s172 + $0x170] sm:$0xff]
        %v1014 = vld [vmem:[%s172 + $0x270] sm:$0xff]
        %v1015 = vld [vmem:[%s172 + $0x370] sm:$0xff]
        %v1016 = vld [vmem:[%s172 + $0x470] sm:$0xff]
        %v1017 = vld [vmem:[%s172 + $0x570] sm:$0xff]
        %v1018 = vld [vmem:[%s172 + $0x670] sm:$0xff]
        %v1019 = vld [vmem:[%s172 + $0x770] sm:$0xff]
        %v1020 = vld [vmem:[%s172 + $0x870] sm:$0xff]
        %v1021 = vld [vmem:[%s172 + $0x970] sm:$0xff]
        %v1022 = vld [vmem:[%s172 + $0xa70] sm:$0xff]
        %v1023 = vld [vmem:[%s172 + $0xb70] sm:$0xff]
        %v1024 = vld [vmem:[%s172 + $0xc70] sm:$0xff]
        %v1025 = vld [vmem:[%s172 + $0xd70] sm:$0xff]
        %v1026 = vld [vmem:[%s172 + $0xe70] sm:$0xff]
        %v1027 = vld [vmem:[%s172 + $0xf70] sm:$0xff]
        %v1028 = vld [vmem:[#allocation5 + $0xe] sm:$0x1]
        %v1030 = vlaneseq
        %v1031 = vshrl.u32 %v1030, 7
        %v1032 = vsub.s32 0, %v1031
        %v1033 = vrot.slane %v1028, %v1032
        %v1035 = vmul.f32 %v1012, %v1033
        %v1036 = vmul.f32 %v1013, %v1033
        %v1037 = vmul.f32 %v1014, %v1033
        %v1038 = vmul.f32 %v1015, %v1033
        %v1039 = vmul.f32 %v1016, %v1033
        %v1040 = vmul.f32 %v1017, %v1033
        %v1041 = vmul.f32 %v1018, %v1033
        %v1042 = vmul.f32 %v1019, %v1033
        %v1043 = vmul.f32 %v1020, %v1033
        %v1044 = vmul.f32 %v1021, %v1033
        %v1045 = vmul.f32 %v1022, %v1033
        %v1046 = vmul.f32 %v1023, %v1033
        %v1047 = vmul.f32 %v1024, %v1033
        %v1048 = vmul.f32 %v1025, %v1033
        %v1049 = vmul.f32 %v1026, %v1033
        %v1050 = vmul.f32 %v1027, %v1033
        %v1051 = vadd.f32 %v996, %v1035
        %v1052 = vadd.f32 %v997, %v1036
        %v1053 = vadd.f32 %v998, %v1037
        %v1054 = vadd.f32 %v999, %v1038
        %v1055 = vadd.f32 %v1000, %v1039
        %v1056 = vadd.f32 %v1001, %v1040
        %v1057 = vadd.f32 %v1002, %v1041
        %v1058 = vadd.f32 %v1003, %v1042
        %v1059 = vadd.f32 %v1004, %v1043
        %v1060 = vadd.f32 %v1005, %v1044
        %v1061 = vadd.f32 %v1006, %v1045
        %v1062 = vadd.f32 %v1007, %v1046
        %v1063 = vadd.f32 %v1008, %v1047
        %v1064 = vadd.f32 %v1009, %v1048
        %v1065 = vadd.f32 %v1010, %v1049
        %v1066 = vadd.f32 %v1011, %v1050
        %v1067 = vld [vmem:[%s172 + $0x78] sm:$0xff]
        %v1068 = vld [vmem:[%s172 + $0x178] sm:$0xff]
        %v1069 = vld [vmem:[%s172 + $0x278] sm:$0xff]
        %v1070 = vld [vmem:[%s172 + $0x378] sm:$0xff]
        %v1071 = vld [vmem:[%s172 + $0x478] sm:$0xff]
        %v1072 = vld [vmem:[%s172 + $0x578] sm:$0xff]
        %v1073 = vld [vmem:[%s172 + $0x678] sm:$0xff]
        %v1074 = vld [vmem:[%s172 + $0x778] sm:$0xff]
        %v1075 = vld [vmem:[%s172 + $0x878] sm:$0xff]
        %v1076 = vld [vmem:[%s172 + $0x978] sm:$0xff]
        %v1077 = vld [vmem:[%s172 + $0xa78] sm:$0xff]
        %v1078 = vld [vmem:[%s172 + $0xb78] sm:$0xff]
        %v1079 = vld [vmem:[%s172 + $0xc78] sm:$0xff]
        %v1080 = vld [vmem:[%s172 + $0xd78] sm:$0xff]
        %v1081 = vld [vmem:[%s172 + $0xe78] sm:$0xff]
        %v1082 = vld [vmem:[%s172 + $0xf78] sm:$0xff]
        %v1083 = vld [vmem:[#allocation5 + $0xf] sm:$0x1]
        %v1085 = vlaneseq
        %v1086 = vshrl.u32 %v1085, 7
        %v1087 = vsub.s32 0, %v1086
        %v1088 = vrot.slane %v1083, %v1087
        %v1090 = vmul.f32 %v1067, %v1088
        %v1091 = vmul.f32 %v1068, %v1088
        %v1092 = vmul.f32 %v1069, %v1088
        %v1093 = vmul.f32 %v1070, %v1088
        %v1094 = vmul.f32 %v1071, %v1088
        %v1095 = vmul.f32 %v1072, %v1088
        %v1096 = vmul.f32 %v1073, %v1088
        %v1097 = vmul.f32 %v1074, %v1088
        %v1098 = vmul.f32 %v1075, %v1088
        %v1099 = vmul.f32 %v1076, %v1088
        %v1100 = vmul.f32 %v1077, %v1088
        %v1101 = vmul.f32 %v1078, %v1088
        %v1102 = vmul.f32 %v1079, %v1088
        %v1103 = vmul.f32 %v1080, %v1088
        %v1104 = vmul.f32 %v1081, %v1088
        %v1105 = vmul.f32 %v1082, %v1088
        %v1106 = vadd.f32 %v1051, %v1090
        %v1107 = vadd.f32 %v1052, %v1091
        %v1108 = vadd.f32 %v1053, %v1092
        %v1109 = vadd.f32 %v1054, %v1093
        %v1110 = vadd.f32 %v1055, %v1094
        %v1111 = vadd.f32 %v1056, %v1095
        %v1112 = vadd.f32 %v1057, %v1096
        %v1113 = vadd.f32 %v1058, %v1097
        %v1114 = vadd.f32 %v1059, %v1098
        %v1115 = vadd.f32 %v1060, %v1099
        %v1116 = vadd.f32 %v1061, %v1100
        %v1117 = vadd.f32 %v1062, %v1101
        %v1118 = vadd.f32 %v1063, %v1102
        %v1119 = vadd.f32 %v1064, %v1103
        %v1120 = vadd.f32 %v1065, %v1104
        %v1121 = vadd.f32 %v1066, %v1105
        %v1122 = vld [vmem:[%s172 + $0x80] sm:$0xff]
        %v1123 = vld [vmem:[%s172 + $0x180] sm:$0xff]
        %v1124 = vld [vmem:[%s172 + $0x280] sm:$0xff]
        %v1125 = vld [vmem:[%s172 + $0x380] sm:$0xff]
        %v1126 = vld [vmem:[%s172 + $0x480] sm:$0xff]
        %v1127 = vld [vmem:[%s172 + $0x580] sm:$0xff]
        %v1128 = vld [vmem:[%s172 + $0x680] sm:$0xff]
        %v1129 = vld [vmem:[%s172 + $0x780] sm:$0xff]
        %v1130 = vld [vmem:[%s172 + $0x880] sm:$0xff]
        %v1131 = vld [vmem:[%s172 + $0x980] sm:$0xff]
        %v1132 = vld [vmem:[%s172 + $0xa80] sm:$0xff]
        %v1133 = vld [vmem:[%s172 + $0xb80] sm:$0xff]
        %v1134 = vld [vmem:[%s172 + $0xc80] sm:$0xff]
        %v1135 = vld [vmem:[%s172 + $0xd80] sm:$0xff]
        %v1136 = vld [vmem:[%s172 + $0xe80] sm:$0xff]
        %v1137 = vld [vmem:[%s172 + $0xf80] sm:$0xff]
        %v1138 = vld [vmem:[#allocation5 + $0x10] sm:$0x1]
        %v1140 = vlaneseq
        %v1141 = vshrl.u32 %v1140, 7
        %v1142 = vsub.s32 0, %v1141
        %v1143 = vrot.slane %v1138, %v1142
        %v1145 = vmul.f32 %v1122, %v1143
        %v1146 = vmul.f32 %v1123, %v1143
        %v1147 = vmul.f32 %v1124, %v1143
        %v1148 = vmul.f32 %v1125, %v1143
        %v1149 = vmul.f32 %v1126, %v1143
        %v1150 = vmul.f32 %v1127, %v1143
        %v1151 = vmul.f32 %v1128, %v1143
        %v1152 = vmul.f32 %v1129, %v1143
        %v1153 = vmul.f32 %v1130, %v1143
        %v1154 = vmul.f32 %v1131, %v1143
        %v1155 = vmul.f32 %v1132, %v1143
        %v1156 = vmul.f32 %v1133, %v1143
        %v1157 = vmul.f32 %v1134, %v1143
        %v1158 = vmul.f32 %v1135, %v1143
        %v1159 = vmul.f32 %v1136, %v1143
        %v1160 = vmul.f32 %v1137, %v1143
        %v1161 = vadd.f32 %v1106, %v1145
        %v1162 = vadd.f32 %v1107, %v1146
        %v1163 = vadd.f32 %v1108, %v1147
        %v1164 = vadd.f32 %v1109, %v1148
        %v1165 = vadd.f32 %v1110, %v1149
        %v1166 = vadd.f32 %v1111, %v1150
        %v1167 = vadd.f32 %v1112, %v1151
        %v1168 = vadd.f32 %v1113, %v1152
        %v1169 = vadd.f32 %v1114, %v1153
        %v1170 = vadd.f32 %v1115, %v1154
        %v1171 = vadd.f32 %v1116, %v1155
        %v1172 = vadd.f32 %v1117, %v1156
        %v1173 = vadd.f32 %v1118, %v1157
        %v1174 = vadd.f32 %v1119, %v1158
        %v1175 = vadd.f32 %v1120, %v1159
        %v1176 = vadd.f32 %v1121, %v1160
        %v1177 = vld [vmem:[%s172 + $0x88] sm:$0xff]
        %v1178 = vld [vmem:[%s172 + $0x188] sm:$0xff]
        %v1179 = vld [vmem:[%s172 + $0x288] sm:$0xff]
        %v1180 = vld [vmem:[%s172 + $0x388] sm:$0xff]
        %v1181 = vld [vmem:[%s172 + $0x488] sm:$0xff]
        %v1182 = vld [vmem:[%s172 + $0x588] sm:$0xff]
        %v1183 = vld [vmem:[%s172 + $0x688] sm:$0xff]
        %v1184 = vld [vmem:[%s172 + $0x788] sm:$0xff]
        %v1185 = vld [vmem:[%s172 + $0x888] sm:$0xff]
        %v1186 = vld [vmem:[%s172 + $0x988] sm:$0xff]
        %v1187 = vld [vmem:[%s172 + $0xa88] sm:$0xff]
        %v1188 = vld [vmem:[%s172 + $0xb88] sm:$0xff]
        %v1189 = vld [vmem:[%s172 + $0xc88] sm:$0xff]
        %v1190 = vld [vmem:[%s172 + $0xd88] sm:$0xff]
        %v1191 = vld [vmem:[%s172 + $0xe88] sm:$0xff]
        %v1192 = vld [vmem:[%s172 + $0xf88] sm:$0xff]
        %v1193 = vld [vmem:[#allocation5 + $0x11] sm:$0x1]
        %v1195 = vlaneseq
        %v1196 = vshrl.u32 %v1195, 7
        %v1197 = vsub.s32 0, %v1196
        %v1198 = vrot.slane %v1193, %v1197
        %v1200 = vmul.f32 %v1177, %v1198
        %v1201 = vmul.f32 %v1178, %v1198
        %v1202 = vmul.f32 %v1179, %v1198
        %v1203 = vmul.f32 %v1180, %v1198
        %v1204 = vmul.f32 %v1181, %v1198
        %v1205 = vmul.f32 %v1182, %v1198
        %v1206 = vmul.f32 %v1183, %v1198
        %v1207 = vmul.f32 %v1184, %v1198
        %v1208 = vmul.f32 %v1185, %v1198
        %v1209 = vmul.f32 %v1186, %v1198
        %v1210 = vmul.f32 %v1187, %v1198
        %v1211 = vmul.f32 %v1188, %v1198
        %v1212 = vmul.f32 %v1189, %v1198
        %v1213 = vmul.f32 %v1190, %v1198
        %v1214 = vmul.f32 %v1191, %v1198
        %v1215 = vmul.f32 %v1192, %v1198
        %v1216 = vadd.f32 %v1161, %v1200
        %v1217 = vadd.f32 %v1162, %v1201
        %v1218 = vadd.f32 %v1163, %v1202
        %v1219 = vadd.f32 %v1164, %v1203
        %v1220 = vadd.f32 %v1165, %v1204
        %v1221 = vadd.f32 %v1166, %v1205
        %v1222 = vadd.f32 %v1167, %v1206
        %v1223 = vadd.f32 %v1168, %v1207
        %v1224 = vadd.f32 %v1169, %v1208
        %v1225 = vadd.f32 %v1170, %v1209
        %v1226 = vadd.f32 %v1171, %v1210
        %v1227 = vadd.f32 %v1172, %v1211
        %v1228 = vadd.f32 %v1173, %v1212
        %v1229 = vadd.f32 %v1174, %v1213
        %v1230 = vadd.f32 %v1175, %v1214
        %v1231 = vadd.f32 %v1176, %v1215
        %v1232 = vld [vmem:[%s172 + $0x90] sm:$0xff]
        %v1233 = vld [vmem:[%s172 + $0x190] sm:$0xff]
        %v1234 = vld [vmem:[%s172 + $0x290] sm:$0xff]
        %v1235 = vld [vmem:[%s172 + $0x390] sm:$0xff]
        %v1236 = vld [vmem:[%s172 + $0x490] sm:$0xff]
        %v1237 = vld [vmem:[%s172 + $0x590] sm:$0xff]
        %v1238 = vld [vmem:[%s172 + $0x690] sm:$0xff]
        %v1239 = vld [vmem:[%s172 + $0x790] sm:$0xff]
        %v1240 = vld [vmem:[%s172 + $0x890] sm:$0xff]
        %v1241 = vld [vmem:[%s172 + $0x990] sm:$0xff]
        %v1242 = vld [vmem:[%s172 + $0xa90] sm:$0xff]
        %v1243 = vld [vmem:[%s172 + $0xb90] sm:$0xff]
        %v1244 = vld [vmem:[%s172 + $0xc90] sm:$0xff]
        %v1245 = vld [vmem:[%s172 + $0xd90] sm:$0xff]
        %v1246 = vld [vmem:[%s172 + $0xe90] sm:$0xff]
        %v1247 = vld [vmem:[%s172 + $0xf90] sm:$0xff]
        %v1248 = vld [vmem:[#allocation5 + $0x12] sm:$0x1]
        %v1250 = vlaneseq
        %v1251 = vshrl.u32 %v1250, 7
        %v1252 = vsub.s32 0, %v1251
        %v1253 = vrot.slane %v1248, %v1252
        %v1255 = vmul.f32 %v1232, %v1253
        %v1256 = vmul.f32 %v1233, %v1253
        %v1257 = vmul.f32 %v1234, %v1253
        %v1258 = vmul.f32 %v1235, %v1253
        %v1259 = vmul.f32 %v1236, %v1253
        %v1260 = vmul.f32 %v1237, %v1253
        %v1261 = vmul.f32 %v1238, %v1253
        %v1262 = vmul.f32 %v1239, %v1253
        %v1263 = vmul.f32 %v1240, %v1253
        %v1264 = vmul.f32 %v1241, %v1253
        %v1265 = vmul.f32 %v1242, %v1253
        %v1266 = vmul.f32 %v1243, %v1253
        %v1267 = vmul.f32 %v1244, %v1253
        %v1268 = vmul.f32 %v1245, %v1253
        %v1269 = vmul.f32 %v1246, %v1253
        %v1270 = vmul.f32 %v1247, %v1253
        %v1271 = vadd.f32 %v1216, %v1255
        %v1272 = vadd.f32 %v1217, %v1256
        %v1273 = vadd.f32 %v1218, %v1257
        %v1274 = vadd.f32 %v1219, %v1258
        %v1275 = vadd.f32 %v1220, %v1259
        %v1276 = vadd.f32 %v1221, %v1260
        %v1277 = vadd.f32 %v1222, %v1261
        %v1278 = vadd.f32 %v1223, %v1262
        %v1279 = vadd.f32 %v1224, %v1263
        %v1280 = vadd.f32 %v1225, %v1264
        %v1281 = vadd.f32 %v1226, %v1265
        %v1282 = vadd.f32 %v1227, %v1266
        %v1283 = vadd.f32 %v1228, %v1267
        %v1284 = vadd.f32 %v1229, %v1268
        %v1285 = vadd.f32 %v1230, %v1269
        %v1286 = vadd.f32 %v1231, %v1270
        %v1287 = vld [vmem:[%s172 + $0x98] sm:$0xff]
        %v1288 = vld [vmem:[%s172 + $0x198] sm:$0xff]
        %v1289 = vld [vmem:[%s172 + $0x298] sm:$0xff]
        %v1290 = vld [vmem:[%s172 + $0x398] sm:$0xff]
        %v1291 = vld [vmem:[%s172 + $0x498] sm:$0xff]
        %v1292 = vld [vmem:[%s172 + $0x598] sm:$0xff]
        %v1293 = vld [vmem:[%s172 + $0x698] sm:$0xff]
        %v1294 = vld [vmem:[%s172 + $0x798] sm:$0xff]
        %v1295 = vld [vmem:[%s172 + $0x898] sm:$0xff]
        %v1296 = vld [vmem:[%s172 + $0x998] sm:$0xff]
        %v1297 = vld [vmem:[%s172 + $0xa98] sm:$0xff]
        %v1298 = vld [vmem:[%s172 + $0xb98] sm:$0xff]
        %v1299 = vld [vmem:[%s172 + $0xc98] sm:$0xff]
        %v1300 = vld [vmem:[%s172 + $0xd98] sm:$0xff]
        %v1301 = vld [vmem:[%s172 + $0xe98] sm:$0xff]
        %v1302 = vld [vmem:[%s172 + $0xf98] sm:$0xff]
        %v1303 = vld [vmem:[#allocation5 + $0x13] sm:$0x1]
        %v1305 = vlaneseq
        %v1306 = vshrl.u32 %v1305, 7
        %v1307 = vsub.s32 0, %v1306
        %v1308 = vrot.slane %v1303, %v1307
        %v1310 = vmul.f32 %v1287, %v1308
        %v1311 = vmul.f32 %v1288, %v1308
        %v1312 = vmul.f32 %v1289, %v1308
        %v1313 = vmul.f32 %v1290, %v1308
        %v1314 = vmul.f32 %v1291, %v1308
        %v1315 = vmul.f32 %v1292, %v1308
        %v1316 = vmul.f32 %v1293, %v1308
        %v1317 = vmul.f32 %v1294, %v1308
        %v1318 = vmul.f32 %v1295, %v1308
        %v1319 = vmul.f32 %v1296, %v1308
        %v1320 = vmul.f32 %v1297, %v1308
        %v1321 = vmul.f32 %v1298, %v1308
        %v1322 = vmul.f32 %v1299, %v1308
        %v1323 = vmul.f32 %v1300, %v1308
        %v1324 = vmul.f32 %v1301, %v1308
        %v1325 = vmul.f32 %v1302, %v1308
        %v1326 = vadd.f32 %v1271, %v1310
        %v1327 = vadd.f32 %v1272, %v1311
        %v1328 = vadd.f32 %v1273, %v1312
        %v1329 = vadd.f32 %v1274, %v1313
        %v1330 = vadd.f32 %v1275, %v1314
        %v1331 = vadd.f32 %v1276, %v1315
        %v1332 = vadd.f32 %v1277, %v1316
        %v1333 = vadd.f32 %v1278, %v1317
        %v1334 = vadd.f32 %v1279, %v1318
        %v1335 = vadd.f32 %v1280, %v1319
        %v1336 = vadd.f32 %v1281, %v1320
        %v1337 = vadd.f32 %v1282, %v1321
        %v1338 = vadd.f32 %v1283, %v1322
        %v1339 = vadd.f32 %v1284, %v1323
        %v1340 = vadd.f32 %v1285, %v1324
        %v1341 = vadd.f32 %v1286, %v1325
        %v1342 = vld [vmem:[%s172 + $0xa0] sm:$0xff]
        %v1343 = vld [vmem:[%s172 + $0x1a0] sm:$0xff]
        %v1344 = vld [vmem:[%s172 + $0x2a0] sm:$0xff]
        %v1345 = vld [vmem:[%s172 + $0x3a0] sm:$0xff]
        %v1346 = vld [vmem:[%s172 + $0x4a0] sm:$0xff]
        %v1347 = vld [vmem:[%s172 + $0x5a0] sm:$0xff]
        %v1348 = vld [vmem:[%s172 + $0x6a0] sm:$0xff]
        %v1349 = vld [vmem:[%s172 + $0x7a0] sm:$0xff]
        %v1350 = vld [vmem:[%s172 + $0x8a0] sm:$0xff]
        %v1351 = vld [vmem:[%s172 + $0x9a0] sm:$0xff]
        %v1352 = vld [vmem:[%s172 + $0xaa0] sm:$0xff]
        %v1353 = vld [vmem:[%s172 + $0xba0] sm:$0xff]
        %v1354 = vld [vmem:[%s172 + $0xca0] sm:$0xff]
        %v1355 = vld [vmem:[%s172 + $0xda0] sm:$0xff]
        %v1356 = vld [vmem:[%s172 + $0xea0] sm:$0xff]
        %v1357 = vld [vmem:[%s172 + $0xfa0] sm:$0xff]
        %v1358 = vld [vmem:[#allocation5 + $0x14] sm:$0x1]
        %v1360 = vlaneseq
        %v1361 = vshrl.u32 %v1360, 7
        %v1362 = vsub.s32 0, %v1361
        %v1363 = vrot.slane %v1358, %v1362
        %v1365 = vmul.f32 %v1342, %v1363
        %v1366 = vmul.f32 %v1343, %v1363
        %v1367 = vmul.f32 %v1344, %v1363
        %v1368 = vmul.f32 %v1345, %v1363
        %v1369 = vmul.f32 %v1346, %v1363
        %v1370 = vmul.f32 %v1347, %v1363
        %v1371 = vmul.f32 %v1348, %v1363
        %v1372 = vmul.f32 %v1349, %v1363
        %v1373 = vmul.f32 %v1350, %v1363
        %v1374 = vmul.f32 %v1351, %v1363
        %v1375 = vmul.f32 %v1352, %v1363
        %v1376 = vmul.f32 %v1353, %v1363
        %v1377 = vmul.f32 %v1354, %v1363
        %v1378 = vmul.f32 %v1355, %v1363
        %v1379 = vmul.f32 %v1356, %v1363
        %v1380 = vmul.f32 %v1357, %v1363
        %v1381 = vadd.f32 %v1326, %v1365
        %v1382 = vadd.f32 %v1327, %v1366
        %v1383 = vadd.f32 %v1328, %v1367
        %v1384 = vadd.f32 %v1329, %v1368
        %v1385 = vadd.f32 %v1330, %v1369
        %v1386 = vadd.f32 %v1331, %v1370
        %v1387 = vadd.f32 %v1332, %v1371
        %v1388 = vadd.f32 %v1333, %v1372
        %v1389 = vadd.f32 %v1334, %v1373
        %v1390 = vadd.f32 %v1335, %v1374
        %v1391 = vadd.f32 %v1336, %v1375
        %v1392 = vadd.f32 %v1337, %v1376
        %v1393 = vadd.f32 %v1338, %v1377
        %v1394 = vadd.f32 %v1339, %v1378
        %v1395 = vadd.f32 %v1340, %v1379
        %v1396 = vadd.f32 %v1341, %v1380
        %v1397 = vld [vmem:[%s172 + $0xa8] sm:$0xff]
        %v1398 = vld [vmem:[%s172 + $0x1a8] sm:$0xff]
        %v1399 = vld [vmem:[%s172 + $0x2a8] sm:$0xff]
        %v1400 = vld [vmem:[%s172 + $0x3a8] sm:$0xff]
        %v1401 = vld [vmem:[%s172 + $0x4a8] sm:$0xff]
        %v1402 = vld [vmem:[%s172 + $0x5a8] sm:$0xff]
        %v1403 = vld [vmem:[%s172 + $0x6a8] sm:$0xff]
        %v1404 = vld [vmem:[%s172 + $0x7a8] sm:$0xff]
        %v1405 = vld [vmem:[%s172 + $0x8a8] sm:$0xff]
        %v1406 = vld [vmem:[%s172 + $0x9a8] sm:$0xff]
        %v1407 = vld [vmem:[%s172 + $0xaa8] sm:$0xff]
        %v1408 = vld [vmem:[%s172 + $0xba8] sm:$0xff]
        %v1409 = vld [vmem:[%s172 + $0xca8] sm:$0xff]
        %v1410 = vld [vmem:[%s172 + $0xda8] sm:$0xff]
        %v1411 = vld [vmem:[%s172 + $0xea8] sm:$0xff]
        %v1412 = vld [vmem:[%s172 + $0xfa8] sm:$0xff]
        %v1413 = vld [vmem:[#allocation5 + $0x15] sm:$0x1]
        %v1415 = vlaneseq
        %v1416 = vshrl.u32 %v1415, 7
        %v1417 = vsub.s32 0, %v1416
        %v1418 = vrot.slane %v1413, %v1417
        %v1420 = vmul.f32 %v1397, %v1418
        %v1421 = vmul.f32 %v1398, %v1418
        %v1422 = vmul.f32 %v1399, %v1418
        %v1423 = vmul.f32 %v1400, %v1418
        %v1424 = vmul.f32 %v1401, %v1418
        %v1425 = vmul.f32 %v1402, %v1418
        %v1426 = vmul.f32 %v1403, %v1418
        %v1427 = vmul.f32 %v1404, %v1418
        %v1428 = vmul.f32 %v1405, %v1418
        %v1429 = vmul.f32 %v1406, %v1418
        %v1430 = vmul.f32 %v1407, %v1418
        %v1431 = vmul.f32 %v1408, %v1418
        %v1432 = vmul.f32 %v1409, %v1418
        %v1433 = vmul.f32 %v1410, %v1418
        %v1434 = vmul.f32 %v1411, %v1418
        %v1435 = vmul.f32 %v1412, %v1418
        %v1436 = vadd.f32 %v1381, %v1420
        %v1437 = vadd.f32 %v1382, %v1421
        %v1438 = vadd.f32 %v1383, %v1422
        %v1439 = vadd.f32 %v1384, %v1423
        %v1440 = vadd.f32 %v1385, %v1424
        %v1441 = vadd.f32 %v1386, %v1425
        %v1442 = vadd.f32 %v1387, %v1426
        %v1443 = vadd.f32 %v1388, %v1427
        %v1444 = vadd.f32 %v1389, %v1428
        %v1445 = vadd.f32 %v1390, %v1429
        %v1446 = vadd.f32 %v1391, %v1430
        %v1447 = vadd.f32 %v1392, %v1431
        %v1448 = vadd.f32 %v1393, %v1432
        %v1449 = vadd.f32 %v1394, %v1433
        %v1450 = vadd.f32 %v1395, %v1434
        %v1451 = vadd.f32 %v1396, %v1435
        %v1452 = vld [vmem:[%s172 + $0xb0] sm:$0xff]
        %v1453 = vld [vmem:[%s172 + $0x1b0] sm:$0xff]
        %v1454 = vld [vmem:[%s172 + $0x2b0] sm:$0xff]
        %v1455 = vld [vmem:[%s172 + $0x3b0] sm:$0xff]
        %v1456 = vld [vmem:[%s172 + $0x4b0] sm:$0xff]
        %v1457 = vld [vmem:[%s172 + $0x5b0] sm:$0xff]
        %v1458 = vld [vmem:[%s172 + $0x6b0] sm:$0xff]
        %v1459 = vld [vmem:[%s172 + $0x7b0] sm:$0xff]
        %v1460 = vld [vmem:[%s172 + $0x8b0] sm:$0xff]
        %v1461 = vld [vmem:[%s172 + $0x9b0] sm:$0xff]
        %v1462 = vld [vmem:[%s172 + $0xab0] sm:$0xff]
        %v1463 = vld [vmem:[%s172 + $0xbb0] sm:$0xff]
        %v1464 = vld [vmem:[%s172 + $0xcb0] sm:$0xff]
        %v1465 = vld [vmem:[%s172 + $0xdb0] sm:$0xff]
        %v1466 = vld [vmem:[%s172 + $0xeb0] sm:$0xff]
        %v1467 = vld [vmem:[%s172 + $0xfb0] sm:$0xff]
        %v1468 = vld [vmem:[#allocation5 + $0x16] sm:$0x1]
        %v1470 = vlaneseq
        %v1471 = vshrl.u32 %v1470, 7
        %v1472 = vsub.s32 0, %v1471
        %v1473 = vrot.slane %v1468, %v1472
        %v1475 = vmul.f32 %v1452, %v1473
        %v1476 = vmul.f32 %v1453, %v1473
        %v1477 = vmul.f32 %v1454, %v1473
        %v1478 = vmul.f32 %v1455, %v1473
        %v1479 = vmul.f32 %v1456, %v1473
        %v1480 = vmul.f32 %v1457, %v1473
        %v1481 = vmul.f32 %v1458, %v1473
        %v1482 = vmul.f32 %v1459, %v1473
        %v1483 = vmul.f32 %v1460, %v1473
        %v1484 = vmul.f32 %v1461, %v1473
        %v1485 = vmul.f32 %v1462, %v1473
        %v1486 = vmul.f32 %v1463, %v1473
        %v1487 = vmul.f32 %v1464, %v1473
        %v1488 = vmul.f32 %v1465, %v1473
        %v1489 = vmul.f32 %v1466, %v1473
        %v1490 = vmul.f32 %v1467, %v1473
        %v1491 = vadd.f32 %v1436, %v1475
        %v1492 = vadd.f32 %v1437, %v1476
        %v1493 = vadd.f32 %v1438, %v1477
        %v1494 = vadd.f32 %v1439, %v1478
        %v1495 = vadd.f32 %v1440, %v1479
        %v1496 = vadd.f32 %v1441, %v1480
        %v1497 = vadd.f32 %v1442, %v1481
        %v1498 = vadd.f32 %v1443, %v1482
        %v1499 = vadd.f32 %v1444, %v1483
        %v1500 = vadd.f32 %v1445, %v1484
        %v1501 = vadd.f32 %v1446, %v1485
        %v1502 = vadd.f32 %v1447, %v1486
        %v1503 = vadd.f32 %v1448, %v1487
        %v1504 = vadd.f32 %v1449, %v1488
        %v1505 = vadd.f32 %v1450, %v1489
        %v1506 = vadd.f32 %v1451, %v1490
        %v1507 = vld [vmem:[%s172 + $0xb8] sm:$0xff]
        %v1508 = vld [vmem:[%s172 + $0x1b8] sm:$0xff]
        %v1509 = vld [vmem:[%s172 + $0x2b8] sm:$0xff]
        %v1510 = vld [vmem:[%s172 + $0x3b8] sm:$0xff]
        %v1511 = vld [vmem:[%s172 + $0x4b8] sm:$0xff]
        %v1512 = vld [vmem:[%s172 + $0x5b8] sm:$0xff]
        %v1513 = vld [vmem:[%s172 + $0x6b8] sm:$0xff]
        %v1514 = vld [vmem:[%s172 + $0x7b8] sm:$0xff]
        %v1515 = vld [vmem:[%s172 + $0x8b8] sm:$0xff]
        %v1516 = vld [vmem:[%s172 + $0x9b8] sm:$0xff]
        %v1517 = vld [vmem:[%s172 + $0xab8] sm:$0xff]
        %v1518 = vld [vmem:[%s172 + $0xbb8] sm:$0xff]
        %v1519 = vld [vmem:[%s172 + $0xcb8] sm:$0xff]
        %v1520 = vld [vmem:[%s172 + $0xdb8] sm:$0xff]
        %v1521 = vld [vmem:[%s172 + $0xeb8] sm:$0xff]
        %v1522 = vld [vmem:[%s172 + $0xfb8] sm:$0xff]
        %v1523 = vld [vmem:[#allocation5 + $0x17] sm:$0x1]
        %v1525 = vlaneseq
        %v1526 = vshrl.u32 %v1525, 7
        %v1527 = vsub.s32 0, %v1526
        %v1528 = vrot.slane %v1523, %v1527
        %v1530 = vmul.f32 %v1507, %v1528
        %v1531 = vmul.f32 %v1508, %v1528
        %v1532 = vmul.f32 %v1509, %v1528
        %v1533 = vmul.f32 %v1510, %v1528
        %v1534 = vmul.f32 %v1511, %v1528
        %v1535 = vmul.f32 %v1512, %v1528
        %v1536 = vmul.f32 %v1513, %v1528
        %v1537 = vmul.f32 %v1514, %v1528
        %v1538 = vmul.f32 %v1515, %v1528
        %v1539 = vmul.f32 %v1516, %v1528
        %v1540 = vmul.f32 %v1517, %v1528
        %v1541 = vmul.f32 %v1518, %v1528
        %v1542 = vmul.f32 %v1519, %v1528
        %v1543 = vmul.f32 %v1520, %v1528
        %v1544 = vmul.f32 %v1521, %v1528
        %v1545 = vmul.f32 %v1522, %v1528
        %v1546 = vadd.f32 %v1491, %v1530
        %v1547 = vadd.f32 %v1492, %v1531
        %v1548 = vadd.f32 %v1493, %v1532
        %v1549 = vadd.f32 %v1494, %v1533
        %v1550 = vadd.f32 %v1495, %v1534
        %v1551 = vadd.f32 %v1496, %v1535
        %v1552 = vadd.f32 %v1497, %v1536
        %v1553 = vadd.f32 %v1498, %v1537
        %v1554 = vadd.f32 %v1499, %v1538
        %v1555 = vadd.f32 %v1500, %v1539
        %v1556 = vadd.f32 %v1501, %v1540
        %v1557 = vadd.f32 %v1502, %v1541
        %v1558 = vadd.f32 %v1503, %v1542
        %v1559 = vadd.f32 %v1504, %v1543
        %v1560 = vadd.f32 %v1505, %v1544
        %v1561 = vadd.f32 %v1506, %v1545
        %v1562 = vld [vmem:[%s172 + $0xc0] sm:$0xff]
        %v1563 = vld [vmem:[%s172 + $0x1c0] sm:$0xff]
        %v1564 = vld [vmem:[%s172 + $0x2c0] sm:$0xff]
        %v1565 = vld [vmem:[%s172 + $0x3c0] sm:$0xff]
        %v1566 = vld [vmem:[%s172 + $0x4c0] sm:$0xff]
        %v1567 = vld [vmem:[%s172 + $0x5c0] sm:$0xff]
        %v1568 = vld [vmem:[%s172 + $0x6c0] sm:$0xff]
        %v1569 = vld [vmem:[%s172 + $0x7c0] sm:$0xff]
        %v1570 = vld [vmem:[%s172 + $0x8c0] sm:$0xff]
        %v1571 = vld [vmem:[%s172 + $0x9c0] sm:$0xff]
        %v1572 = vld [vmem:[%s172 + $0xac0] sm:$0xff]
        %v1573 = vld [vmem:[%s172 + $0xbc0] sm:$0xff]
        %v1574 = vld [vmem:[%s172 + $0xcc0] sm:$0xff]
        %v1575 = vld [vmem:[%s172 + $0xdc0] sm:$0xff]
        %v1576 = vld [vmem:[%s172 + $0xec0] sm:$0xff]
        %v1577 = vld [vmem:[%s172 + $0xfc0] sm:$0xff]
        %v1578 = vld [vmem:[#allocation5 + $0x18] sm:$0x1]
        %v1580 = vlaneseq
        %v1581 = vshrl.u32 %v1580, 7
        %v1582 = vsub.s32 0, %v1581
        %v1583 = vrot.slane %v1578, %v1582
        %v1585 = vmul.f32 %v1562, %v1583
        %v1586 = vmul.f32 %v1563, %v1583
        %v1587 = vmul.f32 %v1564, %v1583
        %v1588 = vmul.f32 %v1565, %v1583
        %v1589 = vmul.f32 %v1566, %v1583
        %v1590 = vmul.f32 %v1567, %v1583
        %v1591 = vmul.f32 %v1568, %v1583
        %v1592 = vmul.f32 %v1569, %v1583
        %v1593 = vmul.f32 %v1570, %v1583
        %v1594 = vmul.f32 %v1571, %v1583
        %v1595 = vmul.f32 %v1572, %v1583
        %v1596 = vmul.f32 %v1573, %v1583
        %v1597 = vmul.f32 %v1574, %v1583
        %v1598 = vmul.f32 %v1575, %v1583
        %v1599 = vmul.f32 %v1576, %v1583
        %v1600 = vmul.f32 %v1577, %v1583
        %v1601 = vadd.f32 %v1546, %v1585
        %v1602 = vadd.f32 %v1547, %v1586
        %v1603 = vadd.f32 %v1548, %v1587
        %v1604 = vadd.f32 %v1549, %v1588
        %v1605 = vadd.f32 %v1550, %v1589
        %v1606 = vadd.f32 %v1551, %v1590
        %v1607 = vadd.f32 %v1552, %v1591
        %v1608 = vadd.f32 %v1553, %v1592
        %v1609 = vadd.f32 %v1554, %v1593
        %v1610 = vadd.f32 %v1555, %v1594
        %v1611 = vadd.f32 %v1556, %v1595
        %v1612 = vadd.f32 %v1557, %v1596
        %v1613 = vadd.f32 %v1558, %v1597
        %v1614 = vadd.f32 %v1559, %v1598
        %v1615 = vadd.f32 %v1560, %v1599
        %v1616 = vadd.f32 %v1561, %v1600
        %v1617 = vld [vmem:[%s172 + $0xc8] sm:$0xff]
        %v1618 = vld [vmem:[%s172 + $0x1c8] sm:$0xff]
        %v1619 = vld [vmem:[%s172 + $0x2c8] sm:$0xff]
        %v1620 = vld [vmem:[%s172 + $0x3c8] sm:$0xff]
        %v1621 = vld [vmem:[%s172 + $0x4c8] sm:$0xff]
        %v1622 = vld [vmem:[%s172 + $0x5c8] sm:$0xff]
        %v1623 = vld [vmem:[%s172 + $0x6c8] sm:$0xff]
        %v1624 = vld [vmem:[%s172 + $0x7c8] sm:$0xff]
        %v1625 = vld [vmem:[%s172 + $0x8c8] sm:$0xff]
        %v1626 = vld [vmem:[%s172 + $0x9c8] sm:$0xff]
        %v1627 = vld [vmem:[%s172 + $0xac8] sm:$0xff]
        %v1628 = vld [vmem:[%s172 + $0xbc8] sm:$0xff]
        %v1629 = vld [vmem:[%s172 + $0xcc8] sm:$0xff]
        %v1630 = vld [vmem:[%s172 + $0xdc8] sm:$0xff]
        %v1631 = vld [vmem:[%s172 + $0xec8] sm:$0xff]
        %v1632 = vld [vmem:[%s172 + $0xfc8] sm:$0xff]
        %v1633 = vld [vmem:[#allocation5 + $0x19] sm:$0x1]
        %v1635 = vlaneseq
        %v1636 = vshrl.u32 %v1635, 7
        %v1637 = vsub.s32 0, %v1636
        %v1638 = vrot.slane %v1633, %v1637
        %v1640 = vmul.f32 %v1617, %v1638
        %v1641 = vmul.f32 %v1618, %v1638
        %v1642 = vmul.f32 %v1619, %v1638
        %v1643 = vmul.f32 %v1620, %v1638
        %v1644 = vmul.f32 %v1621, %v1638
        %v1645 = vmul.f32 %v1622, %v1638
        %v1646 = vmul.f32 %v1623, %v1638
        %v1647 = vmul.f32 %v1624, %v1638
        %v1648 = vmul.f32 %v1625, %v1638
        %v1649 = vmul.f32 %v1626, %v1638
        %v1650 = vmul.f32 %v1627, %v1638
        %v1651 = vmul.f32 %v1628, %v1638
        %v1652 = vmul.f32 %v1629, %v1638
        %v1653 = vmul.f32 %v1630, %v1638
        %v1654 = vmul.f32 %v1631, %v1638
        %v1655 = vmul.f32 %v1632, %v1638
        %v1656 = vadd.f32 %v1601, %v1640
        %v1657 = vadd.f32 %v1602, %v1641
        %v1658 = vadd.f32 %v1603, %v1642
        %v1659 = vadd.f32 %v1604, %v1643
        %v1660 = vadd.f32 %v1605, %v1644
        %v1661 = vadd.f32 %v1606, %v1645
        %v1662 = vadd.f32 %v1607, %v1646
        %v1663 = vadd.f32 %v1608, %v1647
        %v1664 = vadd.f32 %v1609, %v1648
        %v1665 = vadd.f32 %v1610, %v1649
        %v1666 = vadd.f32 %v1611, %v1650
        %v1667 = vadd.f32 %v1612, %v1651
        %v1668 = vadd.f32 %v1613, %v1652
        %v1669 = vadd.f32 %v1614, %v1653
        %v1670 = vadd.f32 %v1615, %v1654
        %v1671 = vadd.f32 %v1616, %v1655
        %v1672 = vld [vmem:[%s172 + $0xd0] sm:$0xff]
        %v1673 = vld [vmem:[%s172 + $0x1d0] sm:$0xff]
        %v1674 = vld [vmem:[%s172 + $0x2d0] sm:$0xff]
        %v1675 = vld [vmem:[%s172 + $0x3d0] sm:$0xff]
        %v1676 = vld [vmem:[%s172 + $0x4d0] sm:$0xff]
        %v1677 = vld [vmem:[%s172 + $0x5d0] sm:$0xff]
        %v1678 = vld [vmem:[%s172 + $0x6d0] sm:$0xff]
        %v1679 = vld [vmem:[%s172 + $0x7d0] sm:$0xff]
        %v1680 = vld [vmem:[%s172 + $0x8d0] sm:$0xff]
        %v1681 = vld [vmem:[%s172 + $0x9d0] sm:$0xff]
        %v1682 = vld [vmem:[%s172 + $0xad0] sm:$0xff]
        %v1683 = vld [vmem:[%s172 + $0xbd0] sm:$0xff]
        %v1684 = vld [vmem:[%s172 + $0xcd0] sm:$0xff]
        %v1685 = vld [vmem:[%s172 + $0xdd0] sm:$0xff]
        %v1686 = vld [vmem:[%s172 + $0xed0] sm:$0xff]
        %v1687 = vld [vmem:[%s172 + $0xfd0] sm:$0xff]
        %v1688 = vld [vmem:[#allocation5 + $0x1a] sm:$0x1]
        %v1690 = vlaneseq
        %v1691 = vshrl.u32 %v1690, 7
        %v1692 = vsub.s32 0, %v1691
        %v1693 = vrot.slane %v1688, %v1692
        %v1695 = vmul.f32 %v1672, %v1693
        %v1696 = vmul.f32 %v1673, %v1693
        %v1697 = vmul.f32 %v1674, %v1693
        %v1698 = vmul.f32 %v1675, %v1693
        %v1699 = vmul.f32 %v1676, %v1693
        %v1700 = vmul.f32 %v1677, %v1693
        %v1701 = vmul.f32 %v1678, %v1693
        %v1702 = vmul.f32 %v1679, %v1693
        %v1703 = vmul.f32 %v1680, %v1693
        %v1704 = vmul.f32 %v1681, %v1693
        %v1705 = vmul.f32 %v1682, %v1693
        %v1706 = vmul.f32 %v1683, %v1693
        %v1707 = vmul.f32 %v1684, %v1693
        %v1708 = vmul.f32 %v1685, %v1693
        %v1709 = vmul.f32 %v1686, %v1693
        %v1710 = vmul.f32 %v1687, %v1693
        %v1711 = vadd.f32 %v1656, %v1695
        %v1712 = vadd.f32 %v1657, %v1696
        %v1713 = vadd.f32 %v1658, %v1697
        %v1714 = vadd.f32 %v1659, %v1698
        %v1715 = vadd.f32 %v1660, %v1699
        %v1716 = vadd.f32 %v1661, %v1700
        %v1717 = vadd.f32 %v1662, %v1701
        %v1718 = vadd.f32 %v1663, %v1702
        %v1719 = vadd.f32 %v1664, %v1703
        %v1720 = vadd.f32 %v1665, %v1704
        %v1721 = vadd.f32 %v1666, %v1705
        %v1722 = vadd.f32 %v1667, %v1706
        %v1723 = vadd.f32 %v1668, %v1707
        %v1724 = vadd.f32 %v1669, %v1708
        %v1725 = vadd.f32 %v1670, %v1709
        %v1726 = vadd.f32 %v1671, %v1710
        %v1727 = vld [vmem:[%s172 + $0xd8] sm:$0xff]
        %v1728 = vld [vmem:[%s172 + $0x1d8] sm:$0xff]
        %v1729 = vld [vmem:[%s172 + $0x2d8] sm:$0xff]
        %v1730 = vld [vmem:[%s172 + $0x3d8] sm:$0xff]
        %v1731 = vld [vmem:[%s172 + $0x4d8] sm:$0xff]
        %v1732 = vld [vmem:[%s172 + $0x5d8] sm:$0xff]
        %v1733 = vld [vmem:[%s172 + $0x6d8] sm:$0xff]
        %v1734 = vld [vmem:[%s172 + $0x7d8] sm:$0xff]
        %v1735 = vld [vmem:[%s172 + $0x8d8] sm:$0xff]
        %v1736 = vld [vmem:[%s172 + $0x9d8] sm:$0xff]
        %v1737 = vld [vmem:[%s172 + $0xad8] sm:$0xff]
        %v1738 = vld [vmem:[%s172 + $0xbd8] sm:$0xff]
        %v1739 = vld [vmem:[%s172 + $0xcd8] sm:$0xff]
        %v1740 = vld [vmem:[%s172 + $0xdd8] sm:$0xff]
        %v1741 = vld [vmem:[%s172 + $0xed8] sm:$0xff]
        %v1742 = vld [vmem:[%s172 + $0xfd8] sm:$0xff]
        %v1743 = vld [vmem:[#allocation5 + $0x1b] sm:$0x1]
        %v1745 = vlaneseq
        %v1746 = vshrl.u32 %v1745, 7
        %v1747 = vsub.s32 0, %v1746
        %v1748 = vrot.slane %v1743, %v1747
        %v1750 = vmul.f32 %v1727, %v1748
        %v1751 = vmul.f32 %v1728, %v1748
        %v1752 = vmul.f32 %v1729, %v1748
        %v1753 = vmul.f32 %v1730, %v1748
        %v1754 = vmul.f32 %v1731, %v1748
        %v1755 = vmul.f32 %v1732, %v1748
        %v1756 = vmul.f32 %v1733, %v1748
        %v1757 = vmul.f32 %v1734, %v1748
        %v1758 = vmul.f32 %v1735, %v1748
        %v1759 = vmul.f32 %v1736, %v1748
        %v1760 = vmul.f32 %v1737, %v1748
        %v1761 = vmul.f32 %v1738, %v1748
        %v1762 = vmul.f32 %v1739, %v1748
        %v1763 = vmul.f32 %v1740, %v1748
        %v1764 = vmul.f32 %v1741, %v1748
        %v1765 = vmul.f32 %v1742, %v1748
        %v1766 = vadd.f32 %v1711, %v1750
        %v1767 = vadd.f32 %v1712, %v1751
        %v1768 = vadd.f32 %v1713, %v1752
        %v1769 = vadd.f32 %v1714, %v1753
        %v1770 = vadd.f32 %v1715, %v1754
        %v1771 = vadd.f32 %v1716, %v1755
        %v1772 = vadd.f32 %v1717, %v1756
        %v1773 = vadd.f32 %v1718, %v1757
        %v1774 = vadd.f32 %v1719, %v1758
        %v1775 = vadd.f32 %v1720, %v1759
        %v1776 = vadd.f32 %v1721, %v1760
        %v1777 = vadd.f32 %v1722, %v1761
        %v1778 = vadd.f32 %v1723, %v1762
        %v1779 = vadd.f32 %v1724, %v1763
        %v1780 = vadd.f32 %v1725, %v1764
        %v1781 = vadd.f32 %v1726, %v1765
        %v1782 = vld [vmem:[%s172 + $0xe0] sm:$0xff]
        %v1783 = vld [vmem:[%s172 + $0x1e0] sm:$0xff]
        %v1784 = vld [vmem:[%s172 + $0x2e0] sm:$0xff]
        %v1785 = vld [vmem:[%s172 + $0x3e0] sm:$0xff]
        %v1786 = vld [vmem:[%s172 + $0x4e0] sm:$0xff]
        %v1787 = vld [vmem:[%s172 + $0x5e0] sm:$0xff]
        %v1788 = vld [vmem:[%s172 + $0x6e0] sm:$0xff]
        %v1789 = vld [vmem:[%s172 + $0x7e0] sm:$0xff]
        %v1790 = vld [vmem:[%s172 + $0x8e0] sm:$0xff]
        %v1791 = vld [vmem:[%s172 + $0x9e0] sm:$0xff]
        %v1792 = vld [vmem:[%s172 + $0xae0] sm:$0xff]
        %v1793 = vld [vmem:[%s172 + $0xbe0] sm:$0xff]
        %v1794 = vld [vmem:[%s172 + $0xce0] sm:$0xff]
        %v1795 = vld [vmem:[%s172 + $0xde0] sm:$0xff]
        %v1796 = vld [vmem:[%s172 + $0xee0] sm:$0xff]
        %v1797 = vld [vmem:[%s172 + $0xfe0] sm:$0xff]
        %v1798 = vld [vmem:[#allocation5 + $0x1c] sm:$0x1]
        %v1800 = vlaneseq
        %v1801 = vshrl.u32 %v1800, 7
        %v1802 = vsub.s32 0, %v1801
        %v1803 = vrot.slane %v1798, %v1802
        %v1805 = vmul.f32 %v1782, %v1803
        %v1806 = vmul.f32 %v1783, %v1803
        %v1807 = vmul.f32 %v1784, %v1803
        %v1808 = vmul.f32 %v1785, %v1803
        %v1809 = vmul.f32 %v1786, %v1803
        %v1810 = vmul.f32 %v1787, %v1803
        %v1811 = vmul.f32 %v1788, %v1803
        %v1812 = vmul.f32 %v1789, %v1803
        %v1813 = vmul.f32 %v1790, %v1803
        %v1814 = vmul.f32 %v1791, %v1803
        %v1815 = vmul.f32 %v1792, %v1803
        %v1816 = vmul.f32 %v1793, %v1803
        %v1817 = vmul.f32 %v1794, %v1803
        %v1818 = vmul.f32 %v1795, %v1803
        %v1819 = vmul.f32 %v1796, %v1803
        %v1820 = vmul.f32 %v1797, %v1803
        %v1821 = vadd.f32 %v1766, %v1805
        %v1822 = vadd.f32 %v1767, %v1806
        %v1823 = vadd.f32 %v1768, %v1807
        %v1824 = vadd.f32 %v1769, %v1808
        %v1825 = vadd.f32 %v1770, %v1809
        %v1826 = vadd.f32 %v1771, %v1810
        %v1827 = vadd.f32 %v1772, %v1811
        %v1828 = vadd.f32 %v1773, %v1812
        %v1829 = vadd.f32 %v1774, %v1813
        %v1830 = vadd.f32 %v1775, %v1814
        %v1831 = vadd.f32 %v1776, %v1815
        %v1832 = vadd.f32 %v1777, %v1816
        %v1833 = vadd.f32 %v1778, %v1817
        %v1834 = vadd.f32 %v1779, %v1818
        %v1835 = vadd.f32 %v1780, %v1819
        %v1836 = vadd.f32 %v1781, %v1820
        %v1837 = vld [vmem:[%s172 + $0xe8] sm:$0xff]
        %v1838 = vld [vmem:[%s172 + $0x1e8] sm:$0xff]
        %v1839 = vld [vmem:[%s172 + $0x2e8] sm:$0xff]
        %v1840 = vld [vmem:[%s172 + $0x3e8] sm:$0xff]
        %v1841 = vld [vmem:[%s172 + $0x4e8] sm:$0xff]
        %v1842 = vld [vmem:[%s172 + $0x5e8] sm:$0xff]
        %v1843 = vld [vmem:[%s172 + $0x6e8] sm:$0xff]
        %v1844 = vld [vmem:[%s172 + $0x7e8] sm:$0xff]
        %v1845 = vld [vmem:[%s172 + $0x8e8] sm:$0xff]
        %v1846 = vld [vmem:[%s172 + $0x9e8] sm:$0xff]
        %v1847 = vld [vmem:[%s172 + $0xae8] sm:$0xff]
        %v1848 = vld [vmem:[%s172 + $0xbe8] sm:$0xff]
        %v1849 = vld [vmem:[%s172 + $0xce8] sm:$0xff]
        %v1850 = vld [vmem:[%s172 + $0xde8] sm:$0xff]
        %v1851 = vld [vmem:[%s172 + $0xee8] sm:$0xff]
        %v1852 = vld [vmem:[%s172 + $0xfe8] sm:$0xff]
        %v1853 = vld [vmem:[#allocation5 + $0x1d] sm:$0x1]
        %v1855 = vlaneseq
        %v1856 = vshrl.u32 %v1855, 7
        %v1857 = vsub.s32 0, %v1856
        %v1858 = vrot.slane %v1853, %v1857
        %v1860 = vmul.f32 %v1837, %v1858
        %v1861 = vmul.f32 %v1838, %v1858
        %v1862 = vmul.f32 %v1839, %v1858
        %v1863 = vmul.f32 %v1840, %v1858
        %v1864 = vmul.f32 %v1841, %v1858
        %v1865 = vmul.f32 %v1842, %v1858
        %v1866 = vmul.f32 %v1843, %v1858
        %v1867 = vmul.f32 %v1844, %v1858
        %v1868 = vmul.f32 %v1845, %v1858
        %v1869 = vmul.f32 %v1846, %v1858
        %v1870 = vmul.f32 %v1847, %v1858
        %v1871 = vmul.f32 %v1848, %v1858
        %v1872 = vmul.f32 %v1849, %v1858
        %v1873 = vmul.f32 %v1850, %v1858
        %v1874 = vmul.f32 %v1851, %v1858
        %v1875 = vmul.f32 %v1852, %v1858
        %v1876 = vadd.f32 %v1821, %v1860
        %v1877 = vadd.f32 %v1822, %v1861
        %v1878 = vadd.f32 %v1823, %v1862
        %v1879 = vadd.f32 %v1824, %v1863
        %v1880 = vadd.f32 %v1825, %v1864
        %v1881 = vadd.f32 %v1826, %v1865
        %v1882 = vadd.f32 %v1827, %v1866
        %v1883 = vadd.f32 %v1828, %v1867
        %v1884 = vadd.f32 %v1829, %v1868
        %v1885 = vadd.f32 %v1830, %v1869
        %v1886 = vadd.f32 %v1831, %v1870
        %v1887 = vadd.f32 %v1832, %v1871
        %v1888 = vadd.f32 %v1833, %v1872
        %v1889 = vadd.f32 %v1834, %v1873
        %v1890 = vadd.f32 %v1835, %v1874
        %v1891 = vadd.f32 %v1836, %v1875
        %v1892 = vld [vmem:[%s172 + $0xf0] sm:$0xff]
        %v1893 = vld [vmem:[%s172 + $0x1f0] sm:$0xff]
        %v1894 = vld [vmem:[%s172 + $0x2f0] sm:$0xff]
        %v1895 = vld [vmem:[%s172 + $0x3f0] sm:$0xff]
        %v1896 = vld [vmem:[%s172 + $0x4f0] sm:$0xff]
        %v1897 = vld [vmem:[%s172 + $0x5f0] sm:$0xff]
        %v1898 = vld [vmem:[%s172 + $0x6f0] sm:$0xff]
        %v1899 = vld [vmem:[%s172 + $0x7f0] sm:$0xff]
        %v1900 = vld [vmem:[%s172 + $0x8f0] sm:$0xff]
        %v1901 = vld [vmem:[%s172 + $0x9f0] sm:$0xff]
        %v1902 = vld [vmem:[%s172 + $0xaf0] sm:$0xff]
        %v1903 = vld [vmem:[%s172 + $0xbf0] sm:$0xff]
        %v1904 = vld [vmem:[%s172 + $0xcf0] sm:$0xff]
        %v1905 = vld [vmem:[%s172 + $0xdf0] sm:$0xff]
        %v1906 = vld [vmem:[%s172 + $0xef0] sm:$0xff]
        %v1907 = vld [vmem:[%s172 + $0xff0] sm:$0xff]
        %v1908 = vld [vmem:[#allocation5 + $0x1e] sm:$0x1]
        %v1910 = vlaneseq
        %v1911 = vshrl.u32 %v1910, 7
        %v1912 = vsub.s32 0, %v1911
        %v1913 = vrot.slane %v1908, %v1912
        %v1915 = vmul.f32 %v1892, %v1913
        %v1916 = vmul.f32 %v1893, %v1913
        %v1917 = vmul.f32 %v1894, %v1913
        %v1918 = vmul.f32 %v1895, %v1913
        %v1919 = vmul.f32 %v1896, %v1913
        %v1920 = vmul.f32 %v1897, %v1913
        %v1921 = vmul.f32 %v1898, %v1913
        %v1922 = vmul.f32 %v1899, %v1913
        %v1923 = vmul.f32 %v1900, %v1913
        %v1924 = vmul.f32 %v1901, %v1913
        %v1925 = vmul.f32 %v1902, %v1913
        %v1926 = vmul.f32 %v1903, %v1913
        %v1927 = vmul.f32 %v1904, %v1913
        %v1928 = vmul.f32 %v1905, %v1913
        %v1929 = vmul.f32 %v1906, %v1913
        %v1930 = vmul.f32 %v1907, %v1913
        %v1931 = vadd.f32 %v1876, %v1915
        %v1932 = vadd.f32 %v1877, %v1916
        %v1933 = vadd.f32 %v1878, %v1917
        %v1934 = vadd.f32 %v1879, %v1918
        %v1935 = vadd.f32 %v1880, %v1919
        %v1936 = vadd.f32 %v1881, %v1920
        %v1937 = vadd.f32 %v1882, %v1921
        %v1938 = vadd.f32 %v1883, %v1922
        %v1939 = vadd.f32 %v1884, %v1923
        %v1940 = vadd.f32 %v1885, %v1924
        %v1941 = vadd.f32 %v1886, %v1925
        %v1942 = vadd.f32 %v1887, %v1926
        %v1943 = vadd.f32 %v1888, %v1927
        %v1944 = vadd.f32 %v1889, %v1928
        %v1945 = vadd.f32 %v1890, %v1929
        %v1946 = vadd.f32 %v1891, %v1930
        %v1947 = vld [vmem:[%s172 + $0xf8] sm:$0xff]
        %v1948 = vld [vmem:[%s172 + $0x1f8] sm:$0xff]
        %v1949 = vld [vmem:[%s172 + $0x2f8] sm:$0xff]
        %v1950 = vld [vmem:[%s172 + $0x3f8] sm:$0xff]
        %v1951 = vld [vmem:[%s172 + $0x4f8] sm:$0xff]
        %v1952 = vld [vmem:[%s172 + $0x5f8] sm:$0xff]
        %v1953 = vld [vmem:[%s172 + $0x6f8] sm:$0xff]
        %v1954 = vld [vmem:[%s172 + $0x7f8] sm:$0xff]
        %v1955 = vld [vmem:[%s172 + $0x8f8] sm:$0xff]
        %v1956 = vld [vmem:[%s172 + $0x9f8] sm:$0xff]
        %v1957 = vld [vmem:[%s172 + $0xaf8] sm:$0xff]
        %v1958 = vld [vmem:[%s172 + $0xbf8] sm:$0xff]
        %v1959 = vld [vmem:[%s172 + $0xcf8] sm:$0xff]
        %v1960 = vld [vmem:[%s172 + $0xdf8] sm:$0xff]
        %v1961 = vld [vmem:[%s172 + $0xef8] sm:$0xff]
        %v1962 = vld [vmem:[%s172 + $0xff8] sm:$0xff]
        %v1963 = vld [vmem:[#allocation5 + $0x1f] sm:$0x1]
        %v1965 = vlaneseq
        %v1966 = vshrl.u32 %v1965, 7
        %v1967 = vsub.s32 0, %v1966
        %v1968 = vrot.slane %v1963, %v1967
        %v1970 = vmul.f32 %v1947, %v1968
        %v1971 = vmul.f32 %v1948, %v1968
        %v1972 = vmul.f32 %v1949, %v1968
        %v1973 = vmul.f32 %v1950, %v1968
        %v1974 = vmul.f32 %v1951, %v1968
        %v1975 = vmul.f32 %v1952, %v1968
        %v1976 = vmul.f32 %v1953, %v1968
        %v1977 = vmul.f32 %v1954, %v1968
        %v1978 = vmul.f32 %v1955, %v1968
        %v1979 = vmul.f32 %v1956, %v1968
        %v1980 = vmul.f32 %v1957, %v1968
        %v1981 = vmul.f32 %v1958, %v1968
        %v1982 = vmul.f32 %v1959, %v1968
        %v1983 = vmul.f32 %v1960, %v1968
        %v1984 = vmul.f32 %v1961, %v1968
        %v1985 = vmul.f32 %v1962, %v1968
        %v1986 = vadd.f32 %v1931, %v1970
        %v1987 = vadd.f32 %v1932, %v1971
        %v1988 = vadd.f32 %v1933, %v1972
        %v1989 = vadd.f32 %v1934, %v1973
        %v1990 = vadd.f32 %v1935, %v1974
        %v1991 = vadd.f32 %v1936, %v1975
        %v1992 = vadd.f32 %v1937, %v1976
        %v1993 = vadd.f32 %v1938, %v1977
        %v1994 = vadd.f32 %v1939, %v1978
        %v1995 = vadd.f32 %v1940, %v1979
        %v1996 = vadd.f32 %v1941, %v1980
        %v1997 = vadd.f32 %v1942, %v1981
        %v1998 = vadd.f32 %v1943, %v1982
        %v1999 = vadd.f32 %v1944, %v1983
        %v2000 = vadd.f32 %v1945, %v1984
        %v2001 = vadd.f32 %v1946, %v1985
        %2002 = vst [vmem:[#allocation2] sm:$0xff] %v1986
        %2003 = vst [vmem:[#allocation2 + $0x8] sm:$0xff] %v1987
        %2004 = vst [vmem:[#allocation2 + $0x10] sm:$0xff] %v1988
        %2005 = vst [vmem:[#allocation2 + $0x18] sm:$0xff] %v1989
        %2006 = vst [vmem:[#allocation2 + $0x20] sm:$0xff] %v1990
        %2007 = vst [vmem:[#allocation2 + $0x28] sm:$0xff] %v1991
        %2008 = vst [vmem:[#allocation2 + $0x30] sm:$0xff] %v1992
        %2009 = vst [vmem:[#allocation2 + $0x38] sm:$0xff] %v1993
        %2010 = vst [vmem:[#allocation2 + $0x40] sm:$0xff] %v1994
        %2011 = vst [vmem:[#allocation2 + $0x48] sm:$0xff] %v1995
        %2012 = vst [vmem:[#allocation2 + $0x50] sm:$0xff] %v1996
        %2013 = vst [vmem:[#allocation2 + $0x58] sm:$0xff] %v1997
        %2014 = vst [vmem:[#allocation2 + $0x60] sm:$0xff] %v1998
        %2015 = vst [vmem:[#allocation2 + $0x68] sm:$0xff] %v1999
        %2016 = vst [vmem:[#allocation2 + $0x70] sm:$0xff] %v2000
        %2017 = vst [vmem:[#allocation2 + $0x78] sm:$0xff] %v2001
        // Predicated region
        $region41: #{tpu_custom_call.1} parent=27 // pred_check
          %p2018 = pneg %p206
        $region42: #{tpu_custom_call.1} parent=27 // pred_check_branch
          %2020 = sbr.rel (%p2018) target = $region44
        $region43: #{tpu_custom_call.1} parent=27 // pred_region
          %v2021 = vld [vmem:[#allocation2] sm:$0xff]
          %v2022 = vld [vmem:[#allocation2 + $0x8] sm:$0xff]
          %v2023 = vld [vmem:[#allocation2 + $0x10] sm:$0xff]
          %v2024 = vld [vmem:[#allocation2 + $0x18] sm:$0xff]
          %v2025 = vld [vmem:[#allocation2 + $0x20] sm:$0xff]
          %v2026 = vld [vmem:[#allocation2 + $0x28] sm:$0xff]
          %v2027 = vld [vmem:[#allocation2 + $0x30] sm:$0xff]
          %v2028 = vld [vmem:[#allocation2 + $0x38] sm:$0xff]
          %v2029 = vld [vmem:[#allocation2 + $0x40] sm:$0xff]
          %v2030 = vld [vmem:[#allocation2 + $0x48] sm:$0xff]
          %v2031 = vld [vmem:[#allocation2 + $0x50] sm:$0xff]
          %v2032 = vld [vmem:[#allocation2 + $0x58] sm:$0xff]
          %v2033 = vld [vmem:[#allocation2 + $0x60] sm:$0xff]
          %v2034 = vld [vmem:[#allocation2 + $0x68] sm:$0xff]
          %v2035 = vld [vmem:[#allocation2 + $0x70] sm:$0xff]
          %v2036 = vld [vmem:[#allocation2 + $0x78] sm:$0xff]
          %2037 = vadd.xlane.f32.xlu0 %v2021
          %v2038 = vpop.xlane.xlu0 %2037
          %2039 = vadd.xlane.f32.xlu0 %v2022
          %v2040 = vpop.xlane.xlu0 %2039
          %2041 = vadd.xlane.f32.xlu0 %v2023
          %v2042 = vpop.xlane.xlu0 %2041
          %2043 = vadd.xlane.f32.xlu0 %v2024
          %v2044 = vpop.xlane.xlu0 %2043
          %2045 = vadd.xlane.f32.xlu0 %v2025
          %v2046 = vpop.xlane.xlu0 %2045
          %2047 = vadd.xlane.f32.xlu0 %v2026
          %v2048 = vpop.xlane.xlu0 %2047
          %2049 = vadd.xlane.f32.xlu0 %v2027
          %v2050 = vpop.xlane.xlu0 %2049
          %2051 = vadd.xlane.f32.xlu0 %v2028
          %v2052 = vpop.xlane.xlu0 %2051
          %2053 = vadd.xlane.f32.xlu0 %v2029
          %v2054 = vpop.xlane.xlu0 %2053
          %2055 = vadd.xlane.f32.xlu0 %v2030
          %v2056 = vpop.xlane.xlu0 %2055
          %2057 = vadd.xlane.f32.xlu0 %v2031
          %v2058 = vpop.xlane.xlu0 %2057
          %2059 = vadd.xlane.f32.xlu0 %v2032
          %v2060 = vpop.xlane.xlu0 %2059
          %2061 = vadd.xlane.f32.xlu0 %v2033
          %v2062 = vpop.xlane.xlu0 %2061
          %2063 = vadd.xlane.f32.xlu0 %v2034
          %v2064 = vpop.xlane.xlu0 %2063
          %2065 = vadd.xlane.f32.xlu0 %v2035
          %v2066 = vpop.xlane.xlu0 %2065
          %2067 = vadd.xlane.f32.xlu0 %v2036
          %v2068 = vpop.xlane.xlu0 %2067
          %vm2069 = vcmask 7168
          %2070 = vst.msk [vmem:[%s204] sm:$0xff] %vm2069, %v2038
          %2071 = vst.msk [vmem:[%s204 + $0x8] sm:$0xff] %vm2069, %v2040
          %2072 = vst.msk [vmem:[%s204 + $0x10] sm:$0xff] %vm2069, %v2042
          %2073 = vst.msk [vmem:[%s204 + $0x18] sm:$0xff] %vm2069, %v2044
          %2074 = vst.msk [vmem:[%s204 + $0x20] sm:$0xff] %vm2069, %v2046
          %2075 = vst.msk [vmem:[%s204 + $0x28] sm:$0xff] %vm2069, %v2048
          %2076 = vst.msk [vmem:[%s204 + $0x30] sm:$0xff] %vm2069, %v2050
          %2077 = vst.msk [vmem:[%s204 + $0x38] sm:$0xff] %vm2069, %v2052
          %2078 = vst.msk [vmem:[%s204 + $0x40] sm:$0xff] %vm2069, %v2054
          %2079 = vst.msk [vmem:[%s204 + $0x48] sm:$0xff] %vm2069, %v2056
          %2080 = vst.msk [vmem:[%s204 + $0x50] sm:$0xff] %vm2069, %v2058
          %2081 = vst.msk [vmem:[%s204 + $0x58] sm:$0xff] %vm2069, %v2060
          %2082 = vst.msk [vmem:[%s204 + $0x60] sm:$0xff] %vm2069, %v2062
          %2083 = vst.msk [vmem:[%s204 + $0x68] sm:$0xff] %vm2069, %v2064
          %2084 = vst.msk [vmem:[%s204 + $0x70] sm:$0xff] %vm2069, %v2066
          %2085 = vst.msk [vmem:[%s204 + $0x78] sm:$0xff] %vm2069, %v2068
        $region44: #{tpu_custom_call.1} parent=27 // pred_fallthru
          _
        %s2086 = smul.u32 16, %s21
        %p2087 = scmp.lt.s32.totalorder %s2086, 31
        %s2088 = scalar_select %p2087, %s2086, 31
        %s2089 = smul.addr %s2088, 8
        %s2090 = scalar_lea.vmem %s2, %s2089
        // Predicated region
        $region45: #{tpu_custom_call.1} parent=27 // pred_check
          %p2091 = pneg %p101
        $region46: #{tpu_custom_call.1} parent=27 // pred_check_branch
          %2093 = sbr.rel (%p2091) target = $region48
        $region47: #{tpu_custom_call.1} parent=27 // pred_region
          %s2094 = smul.u32 16, %s21
        $region48: #{tpu_custom_call.1} parent=27 // pred_fallthru
          _
      $region28: #{tpu_custom_call.1} parent=5 // pred_fallthru
        _
      %p2095 = scmp.le.s32.totalorder 2, %s12
      // Predicated region
      $region49: #{tpu_custom_call.1} parent=5 // pred_check
        %p2096 = pneg %p2095
      $region50: #{tpu_custom_call.1} parent=5 // pred_check_branch
        %2098 = sbr.rel (%p2096) target = $region52
      $region51: #{tpu_custom_call.1} parent=5 // pred_region
        %s2099 = ssub.s32 %s12, 2
        // Predicated region
        $region53: #{tpu_custom_call.1} parent=51 // pred_check
          %p2100 = pneg %p107
        $region54: #{tpu_custom_call.1} parent=51 // pred_check_branch
          %2102 = sbr.rel (%p2100) target = $region56
        $region55: #{tpu_custom_call.1} parent=51 // pred_region
          %s2103 = smul.u32 16, %s23
          %p2104 = scmp.lt.s32.totalorder %s2103, 31
          %s2105 = scalar_select %p2104, %s2103, 31
          %s2106 = smul.addr %s2105, 8
          %s2107 = scalar_lea.vmem %s2, %s2106
        $region56: #{tpu_custom_call.1} parent=51 // pred_fallthru
          _
      $region52: #{tpu_custom_call.1} parent=5 // pred_fallthru
        _
    $region6: #{tpu_custom_call.1} parent=1 // loop_footer
      %s16 = sadd.s32 1, %s12
    $region7: #{tpu_custom_call.1} parent=1 // loop_footer_branch
      %11 = sbr.rel target = $region3
    $region8: #{tpu_custom_call.1} parent=1 // loop_exit
      _
    %2108 = vsyncpa [#allocation4], 1
    %s2109 = scalar_lea.sflag [#allocation4], 1
    %2110 = vsyncpa %s2109, 1
    %2111 = vsyncpa [#allocation6], 1

</llo_original>
